<compile_context>
chip_gen: v5e
topology: v5e:2x2
jax: 0.10.0
libtpu: 0.0.40
codegen_flags: <defaults>
</compile_context>

<pallas_src>
import functools

import numpy as np
import jax
import jax.numpy as jnp
from jax.experimental import pallas as pl
from jax.experimental.pallas import tpu as pltpu

# ---- module hyper-parameters (SSIMLoss.__init__ defaults) -------------------
MAX_VAL = 255.0
FILTER_SIZE = 11
FILTER_SIGMA = 1.5
K1, K2 = 0.01, 0.03
C1 = (K1 * MAX_VAL) ** 2
C2 = (K2 * MAX_VAL) ** 2

# folded constants: working on un-scaled [0,1] images is exactly equivalent to
# scaling by max_val and using C1/C2 (common-scale invariance of SSIM).
C1_FOLDED = C1 / (MAX_VAL * MAX_VAL)   # == K1**2
C2_FOLDED = C2 / (MAX_VAL * MAX_VAL)   # == K2**2

_MXU_PRECISION = jax.lax.Precision.HIGHEST  # full-precision f32 passes on the MXU


def _make_filter_1d(filter_size: int, filter_sigma: float) -> np.ndarray:
    """1D normalized Gaussian; outer(g, g) == PyTorch _make_filter's 2D softmax."""
    v = np.arange(filter_size, dtype=np.float64) + 0.5 - filter_size / 2.0
    g = -(v * v) / (2.0 * filter_sigma * filter_sigma)
    g = np.exp(g - g.max())
    g = g / g.sum()
    return g.astype(np.float32)


def _make_filter_matrices(h: int, w: int, fs: int, sigma: float):
    """Banded constant matrices for the separable 'valid' Gaussian filter.

    Gh: (Ho, H) with Gh[o, o+dy] = g[dy];  Gw: (W, Wo) with Gw[k+dx, k] = g[dx].
    filtered = Gh @ x @ Gw  ==  valid conv2d with outer(g, g).
    """
    g = _make_filter_1d(fs, sigma)
    ho, wo = h - fs + 1, w - fs + 1
    gh = np.zeros((ho, h), dtype=np.float32)
    for o in range(ho):
        gh[o, o:o + fs] = g
    gw = np.zeros((w, wo), dtype=np.float32)
    for k in range(wo):
        gw[k:k + fs, k] = g
    return jnp.asarray(gh), jnp.asarray(gw)


# ----------------------------------------------------------------------------
# Pallas kernel: one (H, W) image plane per grid step -> per-plane SSIM sum.
# ----------------------------------------------------------------------------
def ssim_plane_kernel(x_ref, y_ref, gh_ref, gw_ref, out_ref, *, c1, c2):
    x = x_ref[...].astype(jnp.float32)      # (H, W)
    y = y_ref[...].astype(jnp.float32)      # (H, W)
    gh = gh_ref[...]                        # (Ho, H)
    gw = gw_ref[...]                        # (W, Wo)

    def gauss(q):
        # separable 'valid' Gaussian filter as two MXU matmuls (f32 accumulate)
        r = jnp.dot(gh, q, preferred_element_type=jnp.float32,
                    precision=_MXU_PRECISION)               # (Ho, W)
        return jnp.dot(r, gw, preferred_element_type=jnp.float32,
                       precision=_MXU_PRECISION)            # (Ho, Wo)

    mu1 = gauss(x)
    mu2 = gauss(y)
    e11 = gauss(x * x)
    e22 = gauss(y * y)
    e12 = gauss(x * y)

    mu1_sq = mu1 * mu1
    mu2_sq = mu2 * mu2
    mu12 = mu1 * mu2
    sigma1_sq = e11 - mu1_sq
    sigma2_sq = e22 - mu2_sq
    sigma12 = e12 - mu12

    cs = (2.0 * sigma12 + c2) / (sigma1_sq + sigma2_sq + c2)
    ssim_map = cs * (2.0 * mu12 + c1) / (mu1_sq + mu2_sq + c1)   # (Ho, Wo)

    s = jnp.sum(ssim_map, axis=1, keepdims=True)   # (Ho, 1)
    s = jnp.sum(s, axis=0, keepdims=True)          # (1, 1)
    # lane-dense (8,128) unmasked store of the per-plane partial sum
    out_ref[...] = jnp.broadcast_to(s, out_ref.shape)


def ssim_loss(img1, img2):
    """1 - mean_n(max(SSIM_n, 0)); img1/img2 are NCHW float32 in [0, 1]."""
    assert img1.shape == img2.shape
    N, C, H, W = img1.shape
    fs = FILTER_SIZE
    Ho, Wo = H - fs + 1, W - fs + 1
    gh, gw = _make_filter_matrices(H, W, fs, FILTER_SIGMA)

    kernel = functools.partial(ssim_plane_kernel, c1=C1_FOLDED, c2=C2_FOLDED)

    out = pl.pallas_call(
        kernel,
        out_shape=jax.ShapeDtypeStruct((N, C, 8, 128), jnp.float32),
        grid=(N, C),
        in_specs=[
            pl.BlockSpec((None, None, H, W), lambda n, c: (n, c, 0, 0)),
            pl.BlockSpec((None, None, H, W), lambda n, c: (n, c, 0, 0)),
            pl.BlockSpec((Ho, H), lambda n, c: (0, 0)),   # constant filter matrix
            pl.BlockSpec((W, Wo), lambda n, c: (0, 0)),   # constant filter matrix
        ],
        out_specs=pl.BlockSpec((None, None, 8, 128), lambda n, c: (n, c, 0, 0)),
        compiler_params=pltpu.CompilerParams(
            dimension_semantics=("parallel", "parallel"),
            vmem_limit_bytes=32 * 1024 * 1024,
        ),
    )(img1, img2, gh, gw)

    plane_sums = out[:, :, 0, 0]                                   # (N, C)
    ssim_n = jnp.sum(plane_sums, axis=1) / float(C * Ho * Wo)      # (N,)
    # LowerBound.apply(ssim, 0.0): clamp only after the full per-batch reduction
    ssim_n = jnp.maximum(ssim_n, 0.0)
    return 1.0 - jnp.mean(ssim_n)


# ----------------------------------------------------------------------------
# Pure-JAX reference: original formulation (x*255, unfolded C1/C2, tap-based
# separable filter) — independently checks the scale-fold and the MXU filter.
# ----------------------------------------------------------------------------
def _gauss_sep_ref(x, g, fs):
    n, c, h, w = x.shape
    ho, wo = h - fs + 1, w - fs + 1
    t = g[0] * x[:, :, 0:ho, :]
    for dy in range(1, fs):
        t = t + g[dy] * x[:, :, dy:dy + ho, :]
    o = g[0] * t[:, :, :, 0:wo]
    for dx in range(1, fs):
        o = o + g[dx] * t[:, :, :, dx:dx + wo]
    return o


def _ssim_loss_ref(img1, img2):
    g = tuple(float(v) for v in _make_filter_1d(FILTER_SIZE, FILTER_SIGMA))
    a = img1.astype(jnp.float32) * MAX_VAL
    b = img2.astype(jnp.float32) * MAX_VAL
    mu1 = _gauss_sep_ref(a, g, FILTER_SIZE)
    mu2 = _gauss_sep_ref(b, g, FILTER_SIZE)
    mu1_sq, mu2_sq, mu1_mu2 = mu1 * mu1, mu2 * mu2, mu1 * mu2
    sigma1_sq = _gauss_sep_ref(a * a, g, FILTER_SIZE) - mu1_sq
    sigma2_sq = _gauss_sep_ref(b * b, g, FILTER_SIZE) - mu2_sq
    sigma12 = _gauss_sep_ref(a * b, g, FILTER_SIZE) - mu1_mu2
    cs = (2.0 * sigma12 + C2) / (sigma1_sq + sigma2_sq + C2)
    ssim = cs * (2.0 * mu1_mu2 + C1) / (mu1_sq + mu2_sq + C1)
    ssim = jnp.maximum(ssim.mean(axis=(1, 2, 3)), 0.0)
    return 1.0 - ssim.mean()


if __name__ == "__main__":
    key = jax.random.PRNGKey(0)
    k1, k2 = jax.random.split(key)
    # small shapes consistent with the module: N=2, C=4, H=W=16 (>= filter_size=11)
    img1 = jax.random.uniform(k1, (2, 4, 16, 16), dtype=jnp.float32)
    img2 = jax.random.uniform(k2, (2, 4, 16, 16), dtype=jnp.float32)

    loss = jax.block_until_ready(ssim_loss(img1, img2))
    ref = jax.block_until_ready(_ssim_loss_ref(img1, img2))
    # tolerance allows for MXU multi-pass f32 rounding and the folded-constant
    # reordering; both are tiny relative to a genuine implementation error.
    np.testing.assert_allclose(np.asarray(loss), np.asarray(ref), rtol=1e-3, atol=1e-4)
    print("KERNEL_OK")
</pallas_src>

<mosaic_0001>
module attributes {stable_mosaic.version = 11 : i64} {
  func.func @ssim_plane_kernel(%arg0: i32, %arg1: i32, %arg2: memref<1x1x16x16xf32, #tpu.memory_space<vmem>>, %arg3: memref<1x1x16x16xf32, #tpu.memory_space<vmem>>, %arg4: memref<6x16xf32, #tpu.memory_space<vmem>>, %arg5: memref<16x6xf32, #tpu.memory_space<vmem>>, %arg6: memref<1x1x8x128xf32, #tpu.memory_space<vmem>>) attributes {dimension_semantics = [#tpu.dimension_semantics<parallel>, #tpu.dimension_semantics<parallel>], iteration_bounds = array<i64: 2, 4>, scalar_prefetch = 0 : i64, scratch_operands = 0 : i64, tpu.core_type = #tpu.core_type<tc>, window_params = [{transform_indices = @transform_0, window_bounds = array<i64: 1, 1, 16, 16>}, {transform_indices = @transform_1, window_bounds = array<i64: 1, 1, 16, 16>}, {pipeline_mode = #tpu.pipeline_mode<synchronous>, transform_indices = @transform_2, window_bounds = array<i64: 6, 16>}, {pipeline_mode = #tpu.pipeline_mode<synchronous>, transform_indices = @transform_3, window_bounds = array<i64: 16, 6>}, {transform_indices = @transform_4, window_bounds = array<i64: 1, 1, 8, 128>}]} {
    %c0 = arith.constant 0 : index
    %c0_0 = arith.constant 0 : index
    %c0_1 = arith.constant 0 : index
    %c0_2 = arith.constant 0 : index
    %0 = vector.load %arg2[%c0, %c0_0, %c0_1, %c0_2] : memref<1x1x16x16xf32, #tpu.memory_space<vmem>>, vector<1x1x16x16xf32>
    %1 = vector.shape_cast %0 : vector<1x1x16x16xf32> to vector<16x16xf32>
    %c0_3 = arith.constant 0 : index
    %c0_4 = arith.constant 0 : index
    %c0_5 = arith.constant 0 : index
    %c0_6 = arith.constant 0 : index
    %2 = vector.load %arg3[%c0_3, %c0_4, %c0_5, %c0_6] : memref<1x1x16x16xf32, #tpu.memory_space<vmem>>, vector<1x1x16x16xf32>
    %3 = vector.shape_cast %2 : vector<1x1x16x16xf32> to vector<16x16xf32>
    %c0_7 = arith.constant 0 : index
    %c0_8 = arith.constant 0 : index
    %4 = vector.load %arg4[%c0_7, %c0_8] : memref<6x16xf32, #tpu.memory_space<vmem>>, vector<6x16xf32>
    %c0_9 = arith.constant 0 : index
    %c0_10 = arith.constant 0 : index
    %5 = vector.load %arg5[%c0_9, %c0_10] : memref<16x6xf32, #tpu.memory_space<vmem>>, vector<16x6xf32>
    %cst = arith.constant dense<0.000000e+00> : vector<6x16xf32>
    %6 = tpu.matmul %4, %1, %cst {dimension_numbers = #tpu.dot_dimension_numbers<[1], [0], [0], [1], [0, 0, 1, 1], [], []>, precision = #tpu.contract_precision<fp32>} : vector<6x16xf32>, vector<16x16xf32>, vector<6x16xf32> -> vector<6x16xf32>
    %cst_11 = arith.constant dense<0.000000e+00> : vector<6x6xf32>
    %7 = tpu.matmul %6, %5, %cst_11 {dimension_numbers = #tpu.dot_dimension_numbers<[1], [0], [0], [1], [0, 0, 1, 1], [], []>, precision = #tpu.contract_precision<fp32>} : vector<6x16xf32>, vector<16x6xf32>, vector<6x6xf32> -> vector<6x6xf32>
    %cst_12 = arith.constant dense<0.000000e+00> : vector<6x16xf32>
    %8 = tpu.matmul %4, %3, %cst_12 {dimension_numbers = #tpu.dot_dimension_numbers<[1], [0], [0], [1], [0, 0, 1, 1], [], []>, precision = #tpu.contract_precision<fp32>} : vector<6x16xf32>, vector<16x16xf32>, vector<6x16xf32> -> vector<6x16xf32>
    %cst_13 = arith.constant dense<0.000000e+00> : vector<6x6xf32>
    %9 = tpu.matmul %8, %5, %cst_13 {dimension_numbers = #tpu.dot_dimension_numbers<[1], [0], [0], [1], [0, 0, 1, 1], [], []>, precision = #tpu.contract_precision<fp32>} : vector<6x16xf32>, vector<16x6xf32>, vector<6x6xf32> -> vector<6x6xf32>
    %10 = arith.mulf %1, %1 : vector<16x16xf32>
    %cst_14 = arith.constant dense<0.000000e+00> : vector<6x16xf32>
    %11 = tpu.matmul %4, %10, %cst_14 {dimension_numbers = #tpu.dot_dimension_numbers<[1], [0], [0], [1], [0, 0, 1, 1], [], []>, precision = #tpu.contract_precision<fp32>} : vector<6x16xf32>, vector<16x16xf32>, vector<6x16xf32> -> vector<6x16xf32>
    %cst_15 = arith.constant dense<0.000000e+00> : vector<6x6xf32>
    %12 = tpu.matmul %11, %5, %cst_15 {dimension_numbers = #tpu.dot_dimension_numbers<[1], [0], [0], [1], [0, 0, 1, 1], [], []>, precision = #tpu.contract_precision<fp32>} : vector<6x16xf32>, vector<16x6xf32>, vector<6x6xf32> -> vector<6x6xf32>
    %13 = arith.mulf %3, %3 : vector<16x16xf32>
    %cst_16 = arith.constant dense<0.000000e+00> : vector<6x16xf32>
    %14 = tpu.matmul %4, %13, %cst_16 {dimension_numbers = #tpu.dot_dimension_numbers<[1], [0], [0], [1], [0, 0, 1, 1], [], []>, precision = #tpu.contract_precision<fp32>} : vector<6x16xf32>, vector<16x16xf32>, vector<6x16xf32> -> vector<6x16xf32>
    %cst_17 = arith.constant dense<0.000000e+00> : vector<6x6xf32>
    %15 = tpu.matmul %14, %5, %cst_17 {dimension_numbers = #tpu.dot_dimension_numbers<[1], [0], [0], [1], [0, 0, 1, 1], [], []>, precision = #tpu.contract_precision<fp32>} : vector<6x16xf32>, vector<16x6xf32>, vector<6x6xf32> -> vector<6x6xf32>
    %16 = arith.mulf %1, %3 : vector<16x16xf32>
    %cst_18 = arith.constant dense<0.000000e+00> : vector<6x16xf32>
    %17 = tpu.matmul %4, %16, %cst_18 {dimension_numbers = #tpu.dot_dimension_numbers<[1], [0], [0], [1], [0, 0, 1, 1], [], []>, precision = #tpu.contract_precision<fp32>} : vector<6x16xf32>, vector<16x16xf32>, vector<6x16xf32> -> vector<6x16xf32>
    %cst_19 = arith.constant dense<0.000000e+00> : vector<6x6xf32>
    %18 = tpu.matmul %17, %5, %cst_19 {dimension_numbers = #tpu.dot_dimension_numbers<[1], [0], [0], [1], [0, 0, 1, 1], [], []>, precision = #tpu.contract_precision<fp32>} : vector<6x16xf32>, vector<16x6xf32>, vector<6x6xf32> -> vector<6x6xf32>
    %19 = arith.mulf %7, %7 : vector<6x6xf32>
    %20 = arith.mulf %9, %9 : vector<6x6xf32>
    %21 = arith.mulf %7, %9 : vector<6x6xf32>
    %22 = arith.subf %12, %19 : vector<6x6xf32>
    %23 = arith.subf %15, %20 : vector<6x6xf32>
    %24 = arith.subf %18, %21 : vector<6x6xf32>
    %cst_20 = arith.constant 2.000000e+00 : f32
    %25 = vector.broadcast %cst_20 : f32 to vector<6x6xf32>
    %26 = arith.mulf %25, %24 : vector<6x6xf32>
    %cst_21 = arith.constant 8.99999984E-4 : f32
    %27 = vector.broadcast %cst_21 : f32 to vector<6x6xf32>
    %28 = arith.addf %26, %27 : vector<6x6xf32>
    %29 = arith.addf %22, %23 : vector<6x6xf32>
    %cst_22 = arith.constant 8.99999984E-4 : f32
    %30 = vector.broadcast %cst_22 : f32 to vector<6x6xf32>
    %31 = arith.addf %29, %30 : vector<6x6xf32>
    %32 = arith.divf %28, %31 : vector<6x6xf32>
    %cst_23 = arith.constant 2.000000e+00 : f32
    %33 = vector.broadcast %cst_23 : f32 to vector<6x6xf32>
    %34 = arith.mulf %33, %21 : vector<6x6xf32>
    %cst_24 = arith.constant 9.99999974E-5 : f32
    %35 = vector.broadcast %cst_24 : f32 to vector<6x6xf32>
    %36 = arith.addf %34, %35 : vector<6x6xf32>
    %37 = arith.mulf %32, %36 : vector<6x6xf32>
    %38 = arith.addf %19, %20 : vector<6x6xf32>
    %cst_25 = arith.constant 9.99999974E-5 : f32
    %39 = vector.broadcast %cst_25 : f32 to vector<6x6xf32>
    %40 = arith.addf %38, %39 : vector<6x6xf32>
    %41 = arith.divf %37, %40 : vector<6x6xf32>
    %cst_26 = arith.constant dense<0.000000e+00> : vector<6xf32>
    %42 = vector.multi_reduction <add>, %41, %cst_26 [1] : vector<6x6xf32> to vector<6xf32>
    %43 = vector.shape_cast %42 : vector<6xf32> to vector<6x1xf32>
    %cst_27 = arith.constant dense<0.000000e+00> : vector<1xf32>
    %44 = vector.multi_reduction <add>, %43, %cst_27 [0] : vector<6x1xf32> to vector<1xf32>
    %45 = vector.shape_cast %44 : vector<1xf32> to vector<1x1xf32>
    %46 = vector.shape_cast %45 : vector<1x1xf32> to vector<1x1xf32>
    %47 = vector.broadcast %46 : vector<1x1xf32> to vector<8x128xf32>
    %c0_28 = arith.constant 0 : index
    %c0_29 = arith.constant 0 : index
    %c0_30 = arith.constant 0 : index
    %c0_31 = arith.constant 0 : index
    %48 = vector.load %arg6[%c0_28, %c0_29, %c0_30, %c0_31] : memref<1x1x8x128xf32, #tpu.memory_space<vmem>>, vector<1x1x8x128xf32>
    %49 = vector.shape_cast %48 : vector<1x1x8x128xf32> to vector<8x128xf32>
    %50 = vector.shape_cast %47 : vector<8x128xf32> to vector<1x1x8x128xf32>
    tpu.vector_store %arg6[%c0_28, %c0_29, %c0_30, %c0_31], %50 {strides = array<i32>} : memref<1x1x8x128xf32, #tpu.memory_space<vmem>>, vector<1x1x8x128xf32>,
    return
  }
  func.func @transform_0(%arg0: i32, %arg1: i32) -> (i32, i32, i32, i32) {
    %c0_i32 = arith.constant 0 : i32
    %c0_i32_0 = arith.constant 0 : i32
    %c0_i32_1 = arith.constant 0 : i32
    return %arg0, %arg1, %c0_i32, %c0_i32_0 : i32, i32, i32, i32
  }
  func.func @transform_1(%arg0: i32, %arg1: i32) -> (i32, i32, i32, i32) {
    %c0_i32 = arith.constant 0 : i32
    %c0_i32_0 = arith.constant 0 : i32
    %c0_i32_1 = arith.constant 0 : i32
    return %arg0, %arg1, %c0_i32, %c0_i32_0 : i32, i32, i32, i32
  }
  func.func @transform_2(%arg0: i32, %arg1: i32) -> (i32, i32) {
    %c0_i32 = arith.constant 0 : i32
    %c0_i32_0 = arith.constant 0 : i32
    %c0_i32_1 = arith.constant 0 : i32
    return %c0_i32, %c0_i32_0 : i32, i32
  }
  func.func @transform_3(%arg0: i32, %arg1: i32) -> (i32, i32) {
    %c0_i32 = arith.constant 0 : i32
    %c0_i32_0 = arith.constant 0 : i32
    %c0_i32_1 = arith.constant 0 : i32
    return %c0_i32, %c0_i32_0 : i32, i32
  }
  func.func @transform_4(%arg0: i32, %arg1: i32) -> (i32, i32, i32, i32) {
    %c0_i32 = arith.constant 0 : i32
    %c0_i32_0 = arith.constant 0 : i32
    %c0_i32_1 = arith.constant 0 : i32
    return %arg0, %arg1, %c0_i32, %c0_i32_0 : i32, i32, i32, i32
  }
}

</mosaic_0001>

<llo_original>
// kernel: tpu_custom_call.1
$region0: #{tpu_custom_call.1}
  #allocation0 [shape = 'u32[]', space=smem, size = 0x4, offset = 0x4, fixed_abs, tag = 'smem constant byte address 0x4 - core index']
  #allocation1 [shape = 'u32[72,128]{1,0:T(1,128)}', space=vmem, size = 0x9000, scoped, tag = 'internal scratch']
  %s0 = inlined_call_operand.hbm [shape: f32[2,4,16,16], index: 0, kind: input, shape index: {}]
  %s1 = inlined_call_operand.hbm [shape: f32[2,4,16,16], index: 1, kind: input, shape index: {}]
  %s2 = inlined_call_operand.vmem [shape: f32[6,16], index: 2, kind: input, shape index: {}]
  %s3 = inlined_call_operand.vmem [shape: f32[16,6], index: 3, kind: input, shape index: {}]
  %s4 = inlined_call_operand.hbm [shape: f32[2,4,8,128], index: 4, kind: output, shape index: {}]
  %s5 = sld [smem:[#allocation0]]
  $region57: #{tpu_custom_call.1} parent=0
    _
  %s7 = ssub.s32 1, %s5
  %s8 = scalar_select 0, %s7, %s5
  $region1: #{tpu_custom_call.1} parent=0
    #allocation2 [shape = 'u8[16384]{0}', space=vmem, size = 0x4000, scoped, tag = 'input window, operand 0']
    #allocation3 [shape = 's32[2]{0}', space=sflag, size = 0x8, scoped, tag = 'scoped memory for tpu_custom_call.1']
    #allocation4 [shape = 's32[2]{0}', space=sflag, size = 0x8, scoped, tag = 'scoped memory for tpu_custom_call.1']
    #allocation5 [shape = 'u8[16384]{0}', space=vmem, size = 0x4000, scoped, tag = 'input window, operand 1']
    #allocation6 [shape = 's32[2]{0}', space=sflag, size = 0x8, scoped, tag = 'scoped memory for tpu_custom_call.1']
    #allocation7 [shape = 'u8[8192]{0}', space=vmem, size = 0x2000, scoped, tag = 'output window, operand 0']
    %9 = vsyncpa [#allocation3], 0
    %s10 = scalar_lea.sflag [#allocation3], 1
    %11 = vsyncpa %s10, 0
    %12 = vsyncpa [#allocation6], 0
    %s13 = scalar_lea.sflag [#allocation6], 1
    %14 = vsyncpa %s13, 0
    %15 = vsyncpa [#allocation4], 0
    %s16 = scalar_lea.sflag [#allocation4], 1
    %17 = vsyncpa %s16, 0
    loop: start=0, step=1, limit=10
    $region2: #{tpu_custom_call.1} parent=1 // loop_pre_header
      _
    $region3: #{tpu_custom_call.1} parent=1 // loop_header
      %s19 = sphi 0, %s23
      %p20 = scmp.ge.s32.totalorder %s19, 10
      %s26 = sphi 0, %s38
      %s27 = sphi 0, %s34
      %s28 = sphi 0, %s26
      %s29 = sphi 0, %s27
      %s30 = sphi 0, %s28
      %s31 = sphi 0, %s29
      %s43 = sphi 0, %s45
      %s46 = sphi 0, %s43
      %s47 = sphi 0, %s46
      %s63 = sphi 0, %s47
      %s71 = sphi 0, %s73
      %s74 = sphi 0, %s71
      %s75 = sphi 0, %s74
      %s91 = sphi 0, %s75
      %s95 = sphi 0, %s95
      %s97 = sphi 0, %s95
      %s98 = sphi 0, %s97
      %s112 = sphi 0, %s98
      %s116 = sphi 0, %s116
      %s118 = sphi 0, %s116
      %s119 = sphi 0, %s118
      %s133 = sphi 0, %s119
      %s141 = sphi 0, %s143
      %s144 = sphi 0, %s141
      %s145 = sphi 0, %s144
      %s161 = sphi 0, %s145
    $region4: #{tpu_custom_call.1} parent=1 // loop_header_branch
      %22 = sbr.rel (%p20) target = $region8
    $region5: #{tpu_custom_call.1} parent=1 // loop_body
      %s24 = ssub.s32 %s19, 1
      %s25 = ssub.s32 %s19, 2
      %s32 = sadd.s32 1, %s27
      %p33 = scmp.ge.s32.totalorder %s32, 4
      %s34 = scalar_select %p33, 0, %s32
      %s35 = sadd.s32 1, %s26
      %s36 = scalar_select %p33, %s35, %s26
      %p37 = scmp.ge.s32.totalorder %s36, 2
      %s38 = scalar_select %p37, 0, %s36
      %s39 = ssub.s32 %s26, %s38
      %s40 = ssub.s32 %s27, %s34
      %s41 = sor.u32 %s39, %s40
      %p42 = scmp.eq.s32.totalorder %s41, 0
      %s44 = sadd.s32 %s43, 1
      %s45 = scalar_select %p42, %s43, %s44
      %p48 = pneg %p42
      %p49 = scmp.eq.s32.totalorder %s19, 7
      %p50 = por %p48, %p49
      %p51 = scmp.ne.s32.totalorder %s43, %s46
      %p52 = scmp.eq.s32.totalorder %s19, 0
      %p53 = por %p51, %p52
      %p54 = scmp.ne.s32.totalorder %s43, %s46
      %p55 = scmp.eq.s32.totalorder %s24, 7
      %p56 = por %p54, %p55
      %p57 = scmp.ne.s32.totalorder %s46, %s47
      %p58 = scmp.eq.s32.totalorder %s24, 0
      %p59 = por %p57, %p58
      %p60 = scmp.ne.s32.totalorder %s46, %s47
      %p61 = scmp.eq.s32.totalorder %s25, 7
      %p62 = por %p60, %p61
      %p64 = scmp.ne.s32.totalorder %s47, %s63
      %p65 = scmp.eq.s32.totalorder %s25, 0
      %p66 = por %p64, %p65
      %s67 = ssub.s32 %s26, %s38
      %s68 = ssub.s32 %s27, %s34
      %s69 = sor.u32 %s67, %s68
      %p70 = scmp.eq.s32.totalorder %s69, 0
      %s72 = sadd.s32 %s71, 1
      %s73 = scalar_select %p70, %s71, %s72
      %p76 = pneg %p70
      %p77 = scmp.eq.s32.totalorder %s19, 7
      %p78 = por %p76, %p77
      %p79 = scmp.ne.s32.totalorder %s71, %s74
      %p80 = scmp.eq.s32.totalorder %s19, 0
      %p81 = por %p79, %p80
      %p82 = scmp.ne.s32.totalorder %s71, %s74
      %p83 = scmp.eq.s32.totalorder %s24, 7
      %p84 = por %p82, %p83
      %p85 = scmp.ne.s32.totalorder %s74, %s75
      %p86 = scmp.eq.s32.totalorder %s24, 0
      %p87 = por %p85, %p86
      %p88 = scmp.ne.s32.totalorder %s74, %s75
      %p89 = scmp.eq.s32.totalorder %s25, 7
      %p90 = por %p88, %p89
      %p92 = scmp.ne.s32.totalorder %s75, %s91
      %p93 = scmp.eq.s32.totalorder %s25, 0
      %p94 = por %p92, %p93
      %s96 = sadd.s32 %s95, 1
      %p99 = scmp.eq.s32.totalorder %s19, 7
      %p100 = scmp.ne.s32.totalorder %s95, %s97
      %p101 = scmp.eq.s32.totalorder %s19, 0
      %p102 = por %p100, %p101
      %p103 = scmp.ne.s32.totalorder %s95, %s97
      %p104 = scmp.eq.s32.totalorder %s24, 7
      %p105 = por %p103, %p104
      %p106 = scmp.ne.s32.totalorder %s97, %s98
      %p107 = scmp.eq.s32.totalorder %s24, 0
      %p108 = por %p106, %p107
      %p109 = scmp.ne.s32.totalorder %s97, %s98
      %p110 = scmp.eq.s32.totalorder %s25, 7
      %p111 = por %p109, %p110
      %p113 = scmp.ne.s32.totalorder %s98, %s112
      %p114 = scmp.eq.s32.totalorder %s25, 0
      %p115 = por %p113, %p114
      %s117 = sadd.s32 %s116, 1
      %p120 = scmp.eq.s32.totalorder %s19, 7
      %p121 = scmp.ne.s32.totalorder %s116, %s118
      %p122 = scmp.eq.s32.totalorder %s19, 0
      %p123 = por %p121, %p122
      %p124 = scmp.ne.s32.totalorder %s116, %s118
      %p125 = scmp.eq.s32.totalorder %s24, 7
      %p126 = por %p124, %p125
      %p127 = scmp.ne.s32.totalorder %s118, %s119
      %p128 = scmp.eq.s32.totalorder %s24, 0
      %p129 = por %p127, %p128
      %p130 = scmp.ne.s32.totalorder %s118, %s119
      %p131 = scmp.eq.s32.totalorder %s25, 7
      %p132 = por %p130, %p131
      %p134 = scmp.ne.s32.totalorder %s119, %s133
      %p135 = scmp.eq.s32.totalorder %s25, 0
      %p136 = por %p134, %p135
      %s137 = ssub.s32 %s26, %s38
      %s138 = ssub.s32 %s27, %s34
      %s139 = sor.u32 %s137, %s138
      %p140 = scmp.eq.s32.totalorder %s139, 0
      %s142 = sadd.s32 %s141, 1
      %s143 = scalar_select %p140, %s141, %s142
      %p146 = pneg %p140
      %p147 = scmp.eq.s32.totalorder %s19, 7
      %p148 = por %p146, %p147
      %p149 = scmp.ne.s32.totalorder %s141, %s144
      %p150 = scmp.eq.s32.totalorder %s19, 0
      %p151 = por %p149, %p150
      %p152 = scmp.ne.s32.totalorder %s141, %s144
      %p153 = scmp.eq.s32.totalorder %s24, 7
      %p154 = por %p152, %p153
      %p155 = scmp.ne.s32.totalorder %s144, %s145
      %p156 = scmp.eq.s32.totalorder %s24, 0
      %p157 = por %p155, %p156
      %p158 = scmp.ne.s32.totalorder %s144, %s145
      %p159 = scmp.eq.s32.totalorder %s25, 7
      %p160 = por %p158, %p159
      %p162 = scmp.ne.s32.totalorder %s145, %s161
      %p163 = scmp.eq.s32.totalorder %s25, 0
      %p164 = por %p162, %p163
      %p165 = scmp.le.s32.totalorder 1, %s19
      %p166 = scmp.lt.s32.totalorder %s19, 9
      %p167 = pnand %p165, %p166
      %p168 = pneg %p167
      // Predicated region
      $region9: #{tpu_custom_call.1} parent=5 // pred_check
        _
      $region10: #{tpu_custom_call.1} parent=5 // pred_check_branch
        %170 = sbr.rel (%p167) target = $region12
      $region11: #{tpu_custom_call.1} parent=5 // pred_region
        %s171 = ssub.s32 %s19, 1
        // Predicated region
        $region13: #{tpu_custom_call.1} parent=11 // pred_check
          %p172 = pneg %p108
        $region14: #{tpu_custom_call.1} parent=11 // pred_check_branch
          %174 = sbr.rel (%p172) target = $region16
        $region15: #{tpu_custom_call.1} parent=11 // pred_region
          _
        $region16: #{tpu_custom_call.1} parent=11 // pred_fallthru
          _
        // Predicated region
        $region17: #{tpu_custom_call.1} parent=11 // pred_check
          %p175 = pneg %p129
        $region18: #{tpu_custom_call.1} parent=11 // pred_check_branch
          %177 = sbr.rel (%p175) target = $region20
        $region19: #{tpu_custom_call.1} parent=11 // pred_region
          _
        $region20: #{tpu_custom_call.1} parent=11 // pred_fallthru
          _
      $region12: #{tpu_custom_call.1} parent=5 // pred_fallthru
        _
      %p178 = scmp.lt.s32.totalorder %s19, 8
      // Predicated region
      $region21: #{tpu_custom_call.1} parent=5 // pred_check
        %p179 = pneg %p178
      $region22: #{tpu_custom_call.1} parent=5 // pred_check_branch
        %181 = sbr.rel (%p179) target = $region24
      $region23: #{tpu_custom_call.1} parent=5 // pred_region
        // Predicated region
        $region25: #{tpu_custom_call.1} parent=23 // pred_check
          %p182 = pneg %p53
        $region26: #{tpu_custom_call.1} parent=23 // pred_check_branch
          %184 = sbr.rel (%p182) target = $region28
        $region27: #{tpu_custom_call.1} parent=23 // pred_region
          %s185 = sand.u32 %s43, 1
          %s186 = scalar_lea.sflag [#allocation3], %s185
          %s187 = sand.u32 %s43, 1
          %s188 = smul.addr %s187, 16
          %s189 = scalar_lea.vmem [#allocation2], %s188
          %191 = vsyncadd %s186, 0
          %s192 = smul.addr %s27, 2
          %s193 = smul.addr %s26, 8
          %s194 = sadd.s32 %s192, %s193
          %s195 = smul.addr %s194, 8
          %s196 = scalar_lea.hbm %s0, %s195
          %s197 = sshll.u32 %s196, 4
          %s198 = int_to_ptr.hbm [resolvable:$true] %s197
          %s199 = sshll.u32 %s189, 4
          %s200 = int_to_ptr.vmem [resolvable:$true] %s199
          %205 = dma.hbm_to_vmem [thread:$0]  %s198, 256, %s200, %s186, 128, 128, 8
        $region28: #{tpu_custom_call.1} parent=23 // pred_fallthru
          _
        // Predicated region
        $region29: #{tpu_custom_call.1} parent=23 // pred_check
          %p206 = pneg %p81
        $region30: #{tpu_custom_call.1} parent=23 // pred_check_branch
          %208 = sbr.rel (%p206) target = $region32
        $region31: #{tpu_custom_call.1} parent=23 // pred_region
          %s209 = sand.u32 %s71, 1
          %s210 = scalar_lea.sflag [#allocation6], %s209
          %s211 = sand.u32 %s71, 1
          %s212 = smul.addr %s211, 16
          %s213 = scalar_lea.vmem [#allocation5], %s212
          %215 = vsyncadd %s210, 0
          %s216 = smul.addr %s27, 2
          %s217 = smul.addr %s26, 8
          %s218 = sadd.s32 %s216, %s217
          %s219 = smul.addr %s218, 8
          %s220 = scalar_lea.hbm %s1, %s219
          %s221 = sshll.u32 %s220, 4
          %s222 = int_to_ptr.hbm [resolvable:$true] %s221
          %s223 = sshll.u32 %s213, 4
          %s224 = int_to_ptr.vmem [resolvable:$true] %s223
          %229 = dma.hbm_to_vmem [thread:$0]  %s222, 256, %s224, %s210, 128, 128, 8
        $region32: #{tpu_custom_call.1} parent=23 // pred_fallthru
          _
      $region24: #{tpu_custom_call.1} parent=5 // pred_fallthru
        _
      %p230 = scmp.le.s32.totalorder 1, %s19
      %p231 = scmp.lt.s32.totalorder %s19, 9
      %p232 = pnand %p230, %p231
      %p233 = pneg %p232
      // Predicated region
      $region33: #{tpu_custom_call.1} parent=5 // pred_check
        _
      $region34: #{tpu_custom_call.1} parent=5 // pred_check_branch
        %235 = sbr.rel (%p232) target = $region36
      $region35: #{tpu_custom_call.1} parent=5 // pred_region
        %s236 = ssub.s32 %s19, 1
        %s237 = sand.u32 %s46, 1
        %s238 = scalar_lea.sflag [#allocation3], %s237
        %s239 = sand.u32 %s46, 1
        %s240 = smul.addr %s239, 16
        %s241 = scalar_lea.vmem [#allocation2], %s240
        // Predicated region
        $region37: #{tpu_custom_call.1} parent=35 // pred_check
          %p242 = pneg %p59
        $region38: #{tpu_custom_call.1} parent=35 // pred_check_branch
          %244 = sbr.rel (%p242) target = $region40
        $region39: #{tpu_custom_call.1} parent=35 // pred_region
          %246 = dma.done %s238, 256
        $region40: #{tpu_custom_call.1} parent=35 // pred_fallthru
          _
        %s247 = sand.u32 %s74, 1
        %s248 = scalar_lea.sflag [#allocation6], %s247
        %s249 = sand.u32 %s74, 1
        %s250 = smul.addr %s249, 16
        %s251 = scalar_lea.vmem [#allocation5], %s250
        // Predicated region
        $region41: #{tpu_custom_call.1} parent=35 // pred_check
          %p252 = pneg %p87
        $region42: #{tpu_custom_call.1} parent=35 // pred_check_branch
          %254 = sbr.rel (%p252) target = $region44
        $region43: #{tpu_custom_call.1} parent=35 // pred_region
          %256 = dma.done %s248, 256
        $region44: #{tpu_custom_call.1} parent=35 // pred_fallthru
          _
        %s257 = sand.u32 %s46, 1
        %s258 = scalar_lea.sflag [#allocation3], %s257
        %s259 = sand.u32 %s46, 1
        %s260 = smul.addr %s259, 16
        %s261 = scalar_lea.vmem [#allocation2], %s260
        %p262 = pneg %p59
        %p263 = pneg %p56
        %s264 = sand.u32 %s74, 1
        %s265 = scalar_lea.sflag [#allocation6], %s264
        %s266 = sand.u32 %s74, 1
        %s267 = smul.addr %s266, 16
        %s268 = scalar_lea.vmem [#allocation5], %s267
        %p269 = pneg %p87
        %p270 = pneg %p84
        %p271 = pneg %p108
        %p272 = pneg %p105
        %p273 = pneg %p129
        %p274 = pneg %p126
        %p275 = pneg %p157
        %p276 = pneg %p154
        %s277 = sand.u32 %s144, 1
        %s278 = scalar_lea.sflag [#allocation4], %s277
        %s279 = sand.u32 %s144, 1
        %s280 = smul.addr %s279, 8
        %s281 = scalar_lea.vmem [#allocation7], %s280
        %v282 = vld [vmem:[%s241] sm:$0xff]
        %v283 = vld [vmem:[%s241 + $0x8] sm:$0xff]
        %v284 = vld [vmem:[%s251] sm:$0xff]
        %v285 = vld [vmem:[%s251 + $0x8] sm:$0xff]
        %v286 = vld [vmem:[%s2] sm:$0x3f]
        %v287 = vld [vmem:[%s3] sm:$0xff]
        %v288 = vld [vmem:[%s3 + $0x8] sm:$0xff]
        %vm289 = vcmask 130048
        %v291 = vsel %vm289, %v286, 0
        %293 = vmatpush.msra.mxu0 0.0
        %294 = vmatpush.msra.mxu0 0.0
        %295 = vmatpush.msra.mxu0 0.0
        %296 = vmatpush.msra.mxu0 0.0
        %297 = vmatpush.msra.mxu0 0.0
        %298 = vmatpush.msra.mxu0 0.0
        %299 = vmatpush.msra.mxu0 0.0
        %300 = vmatpush.msra.mxu0 0.0
        %301 = vmatpush.msra.mxu0 0.0
        %302 = vmatpush.msra.mxu0 0.0
        %303 = vmatpush.msra.mxu0 0.0
        %304 = vmatpush.msra.mxu0 0.0
        %305 = vmatpush.msra.mxu0 0.0
        %306 = vmatpush.msra.mxu0 0.0
        %v307 = vand.u32 %v283, 4294901760
        %308 = vmatpush.msra.mxu0 %v307
        %v309 = vand.u32 %v282, 4294901760
        %310 = vmatpush.msra.mxu0 %v309
        %v311 = vand.u32 %v291, 4294901760
        %v312 = vsub.f32 %v291, %v311
        %v313 = vand.u32 %v312, 4294901760
        %v314 = vsub.f32 %v312, %v313
        %v315 = vand.u32 %v314, 4294901760
        %316 = vmatmul.f32.gmra.mxu0 %v315
        %v317 = vpop.f32.mrf.mxu0
        %v318 = vadd.f32 0.0, %v317
        %319 = vdwg.mxu0
        %320 = vmatpush.msra.mxu0 0.0
        %321 = vmatpush.msra.mxu0 0.0
        %322 = vmatpush.msra.mxu0 0.0
        %323 = vmatpush.msra.mxu0 0.0
        %324 = vmatpush.msra.mxu0 0.0
        %325 = vmatpush.msra.mxu0 0.0
        %326 = vmatpush.msra.mxu0 0.0
        %327 = vmatpush.msra.mxu0 0.0
        %328 = vmatpush.msra.mxu0 0.0
        %329 = vmatpush.msra.mxu0 0.0
        %330 = vmatpush.msra.mxu0 0.0
        %331 = vmatpush.msra.mxu0 0.0
        %332 = vmatpush.msra.mxu0 0.0
        %333 = vmatpush.msra.mxu0 0.0
        %v334 = vand.u32 %v283, 4294901760
        %v335 = vsub.f32 %v283, %v334
        %v336 = vand.u32 %v335, 4294901760
        %v337 = vsub.f32 %v335, %v336
        %v338 = vand.u32 %v337, 4294901760
        %339 = vmatpush.msra.mxu0 %v338
        %v340 = vand.u32 %v282, 4294901760
        %v341 = vsub.f32 %v282, %v340
        %v342 = vand.u32 %v341, 4294901760
        %v343 = vsub.f32 %v341, %v342
        %v344 = vand.u32 %v343, 4294901760
        %345 = vmatpush.msra.mxu0 %v344
        %v346 = vand.u32 %v291, 4294901760
        %347 = vmatmul.f32.gmra.mxu0 %v346
        %v348 = vpop.f32.mrf.mxu0
        %v349 = vadd.f32 %v318, %v348
        %350 = vdwg.mxu0
        %351 = vmatpush.msra.mxu0 0.0
        %352 = vmatpush.msra.mxu0 0.0
        %353 = vmatpush.msra.mxu0 0.0
        %354 = vmatpush.msra.mxu0 0.0
        %355 = vmatpush.msra.mxu0 0.0
        %356 = vmatpush.msra.mxu0 0.0
        %357 = vmatpush.msra.mxu0 0.0
        %358 = vmatpush.msra.mxu0 0.0
        %359 = vmatpush.msra.mxu0 0.0
        %360 = vmatpush.msra.mxu0 0.0
        %361 = vmatpush.msra.mxu0 0.0
        %362 = vmatpush.msra.mxu0 0.0
        %363 = vmatpush.msra.mxu0 0.0
        %364 = vmatpush.msra.mxu0 0.0
        %v365 = vand.u32 %v283, 4294901760
        %v366 = vsub.f32 %v283, %v365
        %367 = vmatpush.msra.mxu0 %v366
        %v368 = vand.u32 %v282, 4294901760
        %v369 = vsub.f32 %v282, %v368
        %370 = vmatpush.msra.mxu0 %v369
        %v371 = vand.u32 %v291, 4294901760
        %v372 = vsub.f32 %v291, %v371
        %373 = vmatmul.f32.gmra.mxu0 %v372
        %v374 = vpop.f32.mrf.mxu0
        %v375 = vadd.f32 %v349, %v374
        %376 = vdwg.mxu0
        %377 = vmatpush.msra.mxu0 0.0
        %378 = vmatpush.msra.mxu0 0.0
        %379 = vmatpush.msra.mxu0 0.0
        %380 = vmatpush.msra.mxu0 0.0
        %381 = vmatpush.msra.mxu0 0.0
        %382 = vmatpush.msra.mxu0 0.0
        %383 = vmatpush.msra.mxu0 0.0
        %384 = vmatpush.msra.mxu0 0.0
        %385 = vmatpush.msra.mxu0 0.0
        %386 = vmatpush.msra.mxu0 0.0
        %387 = vmatpush.msra.mxu0 0.0
        %388 = vmatpush.msra.mxu0 0.0
        %389 = vmatpush.msra.mxu0 0.0
        %390 = vmatpush.msra.mxu0 0.0
        %v391 = vand.u32 %v283, 4294901760
        %392 = vmatpush.msra.mxu0 %v391
        %v393 = vand.u32 %v282, 4294901760
        %394 = vmatpush.msra.mxu0 %v393
        %v395 = vand.u32 %v291, 4294901760
        %v396 = vsub.f32 %v291, %v395
        %v397 = vand.u32 %v396, 4294901760
        %398 = vmatmul.f32.gmra.mxu0 %v397
        %v399 = vpop.f32.mrf.mxu0
        %v400 = vadd.f32 %v375, %v399
        %401 = vdwg.mxu0
        %402 = vmatpush.msra.mxu0 0.0
        %403 = vmatpush.msra.mxu0 0.0
        %404 = vmatpush.msra.mxu0 0.0
        %405 = vmatpush.msra.mxu0 0.0
        %406 = vmatpush.msra.mxu0 0.0
        %407 = vmatpush.msra.mxu0 0.0
        %408 = vmatpush.msra.mxu0 0.0
        %409 = vmatpush.msra.mxu0 0.0
        %410 = vmatpush.msra.mxu0 0.0
        %411 = vmatpush.msra.mxu0 0.0
        %412 = vmatpush.msra.mxu0 0.0
        %413 = vmatpush.msra.mxu0 0.0
        %414 = vmatpush.msra.mxu0 0.0
        %415 = vmatpush.msra.mxu0 0.0
        %v416 = vand.u32 %v283, 4294901760
        %v417 = vsub.f32 %v283, %v416
        %v418 = vand.u32 %v417, 4294901760
        %419 = vmatpush.msra.mxu0 %v418
        %v420 = vand.u32 %v282, 4294901760
        %v421 = vsub.f32 %v282, %v420
        %v422 = vand.u32 %v421, 4294901760
        %423 = vmatpush.msra.mxu0 %v422
        %v424 = vand.u32 %v291, 4294901760
        %425 = vmatmul.f32.gmra.mxu0 %v424
        %v426 = vpop.f32.mrf.mxu0
        %v427 = vadd.f32 %v400, %v426
        %428 = vdwg.mxu0
        %429 = vmatpush.msra.mxu0 0.0
        %430 = vmatpush.msra.mxu0 0.0
        %431 = vmatpush.msra.mxu0 0.0
        %432 = vmatpush.msra.mxu0 0.0
        %433 = vmatpush.msra.mxu0 0.0
        %434 = vmatpush.msra.mxu0 0.0
        %435 = vmatpush.msra.mxu0 0.0
        %436 = vmatpush.msra.mxu0 0.0
        %437 = vmatpush.msra.mxu0 0.0
        %438 = vmatpush.msra.mxu0 0.0
        %439 = vmatpush.msra.mxu0 0.0
        %440 = vmatpush.msra.mxu0 0.0
        %441 = vmatpush.msra.mxu0 0.0
        %442 = vmatpush.msra.mxu0 0.0
        %v443 = vand.u32 %v283, 4294901760
        %444 = vmatpush.msra.mxu0 %v443
        %v445 = vand.u32 %v282, 4294901760
        %446 = vmatpush.msra.mxu0 %v445
        %v447 = vand.u32 %v291, 4294901760
        %448 = vmatmul.f32.gmra.mxu0 %v447
        %v449 = vpop.f32.mrf.mxu0
        %v450 = vadd.f32 %v427, %v449
        %451 = vdwg.mxu0
        %v453 = vsel %vm289, %v450, 0
        %455 = vmatpush.msra.mxu0 0.0
        %456 = vmatpush.msra.mxu0 0.0
        %457 = vmatpush.msra.mxu0 0.0
        %458 = vmatpush.msra.mxu0 0.0
        %459 = vmatpush.msra.mxu0 0.0
        %460 = vmatpush.msra.mxu0 0.0
        %461 = vmatpush.msra.mxu0 0.0
        %462 = vmatpush.msra.mxu0 0.0
        %463 = vmatpush.msra.mxu0 0.0
        %464 = vmatpush.msra.mxu0 0.0
        %465 = vmatpush.msra.mxu0 0.0
        %466 = vmatpush.msra.mxu0 0.0
        %467 = vmatpush.msra.mxu0 0.0
        %468 = vmatpush.msra.mxu0 0.0
        %v469 = vand.u32 %v288, 4294901760
        %470 = vmatpush.msra.mxu0 %v469
        %v471 = vand.u32 %v287, 4294901760
        %472 = vmatpush.msra.mxu0 %v471
        %v473 = vand.u32 %v453, 4294901760
        %v474 = vsub.f32 %v453, %v473
        %v475 = vand.u32 %v474, 4294901760
        %v476 = vsub.f32 %v474, %v475
        %v477 = vand.u32 %v476, 4294901760
        %478 = vmatmul.f32.gmra.mxu0 %v477
        %v479 = vpop.f32.mrf.mxu0
        %v480 = vadd.f32 0.0, %v479
        %481 = vdwg.mxu0
        %482 = vmatpush.msra.mxu0 0.0
        %483 = vmatpush.msra.mxu0 0.0
        %484 = vmatpush.msra.mxu0 0.0
        %485 = vmatpush.msra.mxu0 0.0
        %486 = vmatpush.msra.mxu0 0.0
        %487 = vmatpush.msra.mxu0 0.0
        %488 = vmatpush.msra.mxu0 0.0
        %489 = vmatpush.msra.mxu0 0.0
        %490 = vmatpush.msra.mxu0 0.0
        %491 = vmatpush.msra.mxu0 0.0
        %492 = vmatpush.msra.mxu0 0.0
        %493 = vmatpush.msra.mxu0 0.0
        %494 = vmatpush.msra.mxu0 0.0
        %495 = vmatpush.msra.mxu0 0.0
        %v496 = vand.u32 %v288, 4294901760
        %v497 = vsub.f32 %v288, %v496
        %v498 = vand.u32 %v497, 4294901760
        %v499 = vsub.f32 %v497, %v498
        %v500 = vand.u32 %v499, 4294901760
        %501 = vmatpush.msra.mxu0 %v500
        %v502 = vand.u32 %v287, 4294901760
        %v503 = vsub.f32 %v287, %v502
        %v504 = vand.u32 %v503, 4294901760
        %v505 = vsub.f32 %v503, %v504
        %v506 = vand.u32 %v505, 4294901760
        %507 = vmatpush.msra.mxu0 %v506
        %v508 = vand.u32 %v453, 4294901760
        %509 = vmatmul.f32.gmra.mxu0 %v508
        %v510 = vpop.f32.mrf.mxu0
        %v511 = vadd.f32 %v480, %v510
        %512 = vdwg.mxu0
        %513 = vmatpush.msra.mxu0 0.0
        %514 = vmatpush.msra.mxu0 0.0
        %515 = vmatpush.msra.mxu0 0.0
        %516 = vmatpush.msra.mxu0 0.0
        %517 = vmatpush.msra.mxu0 0.0
        %518 = vmatpush.msra.mxu0 0.0
        %519 = vmatpush.msra.mxu0 0.0
        %520 = vmatpush.msra.mxu0 0.0
        %521 = vmatpush.msra.mxu0 0.0
        %522 = vmatpush.msra.mxu0 0.0
        %523 = vmatpush.msra.mxu0 0.0
        %524 = vmatpush.msra.mxu0 0.0
        %525 = vmatpush.msra.mxu0 0.0
        %526 = vmatpush.msra.mxu0 0.0
        %v527 = vand.u32 %v288, 4294901760
        %v528 = vsub.f32 %v288, %v527
        %529 = vmatpush.msra.mxu0 %v528
        %v530 = vand.u32 %v287, 4294901760
        %v531 = vsub.f32 %v287, %v530
        %532 = vmatpush.msra.mxu0 %v531
        %v533 = vand.u32 %v453, 4294901760
        %v534 = vsub.f32 %v453, %v533
        %535 = vmatmul.f32.gmra.mxu0 %v534
        %v536 = vpop.f32.mrf.mxu0
        %v537 = vadd.f32 %v511, %v536
        %538 = vdwg.mxu0
        %539 = vmatpush.msra.mxu0 0.0
        %540 = vmatpush.msra.mxu0 0.0
        %541 = vmatpush.msra.mxu0 0.0
        %542 = vmatpush.msra.mxu0 0.0
        %543 = vmatpush.msra.mxu0 0.0
        %544 = vmatpush.msra.mxu0 0.0
        %545 = vmatpush.msra.mxu0 0.0
        %546 = vmatpush.msra.mxu0 0.0
        %547 = vmatpush.msra.mxu0 0.0
        %548 = vmatpush.msra.mxu0 0.0
        %549 = vmatpush.msra.mxu0 0.0
        %550 = vmatpush.msra.mxu0 0.0
        %551 = vmatpush.msra.mxu0 0.0
        %552 = vmatpush.msra.mxu0 0.0
        %v553 = vand.u32 %v288, 4294901760
        %554 = vmatpush.msra.mxu0 %v553
        %v555 = vand.u32 %v287, 4294901760
        %556 = vmatpush.msra.mxu0 %v555
        %v557 = vand.u32 %v453, 4294901760
        %v558 = vsub.f32 %v453, %v557
        %v559 = vand.u32 %v558, 4294901760
        %560 = vmatmul.f32.gmra.mxu0 %v559
        %v561 = vpop.f32.mrf.mxu0
        %v562 = vadd.f32 %v537, %v561
        %563 = vdwg.mxu0
        %564 = vmatpush.msra.mxu0 0.0
        %565 = vmatpush.msra.mxu0 0.0
        %566 = vmatpush.msra.mxu0 0.0
        %567 = vmatpush.msra.mxu0 0.0
        %568 = vmatpush.msra.mxu0 0.0
        %569 = vmatpush.msra.mxu0 0.0
        %570 = vmatpush.msra.mxu0 0.0
        %571 = vmatpush.msra.mxu0 0.0
        %572 = vmatpush.msra.mxu0 0.0
        %573 = vmatpush.msra.mxu0 0.0
        %574 = vmatpush.msra.mxu0 0.0
        %575 = vmatpush.msra.mxu0 0.0
        %576 = vmatpush.msra.mxu0 0.0
        %577 = vmatpush.msra.mxu0 0.0
        %v578 = vand.u32 %v288, 4294901760
        %v579 = vsub.f32 %v288, %v578
        %v580 = vand.u32 %v579, 4294901760
        %581 = vmatpush.msra.mxu0 %v580
        %v582 = vand.u32 %v287, 4294901760
        %v583 = vsub.f32 %v287, %v582
        %v584 = vand.u32 %v583, 4294901760
        %585 = vmatpush.msra.mxu0 %v584
        %v586 = vand.u32 %v453, 4294901760
        %587 = vmatmul.f32.gmra.mxu0 %v586
        %v588 = vpop.f32.mrf.mxu0
        %v589 = vadd.f32 %v562, %v588
        %590 = vdwg.mxu0
        %591 = vmatpush.msra.mxu0 0.0
        %592 = vmatpush.msra.mxu0 0.0
        %593 = vmatpush.msra.mxu0 0.0
        %594 = vmatpush.msra.mxu0 0.0
        %595 = vmatpush.msra.mxu0 0.0
        %596 = vmatpush.msra.mxu0 0.0
        %597 = vmatpush.msra.mxu0 0.0
        %598 = vmatpush.msra.mxu0 0.0
        %599 = vmatpush.msra.mxu0 0.0
        %600 = vmatpush.msra.mxu0 0.0
        %601 = vmatpush.msra.mxu0 0.0
        %602 = vmatpush.msra.mxu0 0.0
        %603 = vmatpush.msra.mxu0 0.0
        %604 = vmatpush.msra.mxu0 0.0
        %v605 = vand.u32 %v288, 4294901760
        %606 = vmatpush.msra.mxu0 %v605
        %v607 = vand.u32 %v287, 4294901760
        %608 = vmatpush.msra.mxu0 %v607
        %v609 = vand.u32 %v453, 4294901760
        %610 = vmatmul.f32.gmra.mxu0 %v609
        %v611 = vpop.f32.mrf.mxu0
        %v612 = vadd.f32 %v589, %v611
        %613 = vdwg.mxu0
        %614 = vmatpush.msra.mxu0 0.0
        %615 = vmatpush.msra.mxu0 0.0
        %616 = vmatpush.msra.mxu0 0.0
        %617 = vmatpush.msra.mxu0 0.0
        %618 = vmatpush.msra.mxu0 0.0
        %619 = vmatpush.msra.mxu0 0.0
        %620 = vmatpush.msra.mxu0 0.0
        %621 = vmatpush.msra.mxu0 0.0
        %622 = vmatpush.msra.mxu0 0.0
        %623 = vmatpush.msra.mxu0 0.0
        %624 = vmatpush.msra.mxu0 0.0
        %625 = vmatpush.msra.mxu0 0.0
        %626 = vmatpush.msra.mxu0 0.0
        %627 = vmatpush.msra.mxu0 0.0
        %v628 = vand.u32 %v285, 4294901760
        %629 = vmatpush.msra.mxu0 %v628
        %v630 = vand.u32 %v284, 4294901760
        %631 = vmatpush.msra.mxu0 %v630
        %v632 = vand.u32 %v291, 4294901760
        %v633 = vsub.f32 %v291, %v632
        %v634 = vand.u32 %v633, 4294901760
        %v635 = vsub.f32 %v633, %v634
        %v636 = vand.u32 %v635, 4294901760
        %637 = vmatmul.f32.gmra.mxu0 %v636
        %v638 = vpop.f32.mrf.mxu0
        %v639 = vadd.f32 0.0, %v638
        %640 = vdwg.mxu0
        %641 = vmatpush.msra.mxu0 0.0
        %642 = vmatpush.msra.mxu0 0.0
        %643 = vmatpush.msra.mxu0 0.0
        %644 = vmatpush.msra.mxu0 0.0
        %645 = vmatpush.msra.mxu0 0.0
        %646 = vmatpush.msra.mxu0 0.0
        %647 = vmatpush.msra.mxu0 0.0
        %648 = vmatpush.msra.mxu0 0.0
        %649 = vmatpush.msra.mxu0 0.0
        %650 = vmatpush.msra.mxu0 0.0
        %651 = vmatpush.msra.mxu0 0.0
        %652 = vmatpush.msra.mxu0 0.0
        %653 = vmatpush.msra.mxu0 0.0
        %654 = vmatpush.msra.mxu0 0.0
        %v655 = vand.u32 %v285, 4294901760
        %v656 = vsub.f32 %v285, %v655
        %v657 = vand.u32 %v656, 4294901760
        %v658 = vsub.f32 %v656, %v657
        %v659 = vand.u32 %v658, 4294901760
        %660 = vmatpush.msra.mxu0 %v659
        %v661 = vand.u32 %v284, 4294901760
        %v662 = vsub.f32 %v284, %v661
        %v663 = vand.u32 %v662, 4294901760
        %v664 = vsub.f32 %v662, %v663
        %v665 = vand.u32 %v664, 4294901760
        %666 = vmatpush.msra.mxu0 %v665
        %v667 = vand.u32 %v291, 4294901760
        %668 = vmatmul.f32.gmra.mxu0 %v667
        %v669 = vpop.f32.mrf.mxu0
        %v670 = vadd.f32 %v639, %v669
        %671 = vdwg.mxu0
        %672 = vmatpush.msra.mxu0 0.0
        %673 = vmatpush.msra.mxu0 0.0
        %674 = vmatpush.msra.mxu0 0.0
        %675 = vmatpush.msra.mxu0 0.0
        %676 = vmatpush.msra.mxu0 0.0
        %677 = vmatpush.msra.mxu0 0.0
        %678 = vmatpush.msra.mxu0 0.0
        %679 = vmatpush.msra.mxu0 0.0
        %680 = vmatpush.msra.mxu0 0.0
        %681 = vmatpush.msra.mxu0 0.0
        %682 = vmatpush.msra.mxu0 0.0
        %683 = vmatpush.msra.mxu0 0.0
        %684 = vmatpush.msra.mxu0 0.0
        %685 = vmatpush.msra.mxu0 0.0
        %v686 = vand.u32 %v285, 4294901760
        %v687 = vsub.f32 %v285, %v686
        %688 = vmatpush.msra.mxu0 %v687
        %v689 = vand.u32 %v284, 4294901760
        %v690 = vsub.f32 %v284, %v689
        %691 = vmatpush.msra.mxu0 %v690
        %v692 = vand.u32 %v291, 4294901760
        %v693 = vsub.f32 %v291, %v692
        %694 = vmatmul.f32.gmra.mxu0 %v693
        %v695 = vpop.f32.mrf.mxu0
        %v696 = vadd.f32 %v670, %v695
        %697 = vdwg.mxu0
        %698 = vmatpush.msra.mxu0 0.0
        %699 = vmatpush.msra.mxu0 0.0
        %700 = vmatpush.msra.mxu0 0.0
        %701 = vmatpush.msra.mxu0 0.0
        %702 = vmatpush.msra.mxu0 0.0
        %703 = vmatpush.msra.mxu0 0.0
        %704 = vmatpush.msra.mxu0 0.0
        %705 = vmatpush.msra.mxu0 0.0
        %706 = vmatpush.msra.mxu0 0.0
        %707 = vmatpush.msra.mxu0 0.0
        %708 = vmatpush.msra.mxu0 0.0
        %709 = vmatpush.msra.mxu0 0.0
        %710 = vmatpush.msra.mxu0 0.0
        %711 = vmatpush.msra.mxu0 0.0
        %v712 = vand.u32 %v285, 4294901760
        %713 = vmatpush.msra.mxu0 %v712
        %v714 = vand.u32 %v284, 4294901760
        %715 = vmatpush.msra.mxu0 %v714
        %v716 = vand.u32 %v291, 4294901760
        %v717 = vsub.f32 %v291, %v716
        %v718 = vand.u32 %v717, 4294901760
        %719 = vmatmul.f32.gmra.mxu0 %v718
        %v720 = vpop.f32.mrf.mxu0
        %v721 = vadd.f32 %v696, %v720
        %722 = vdwg.mxu0
        %723 = vmatpush.msra.mxu0 0.0
        %724 = vmatpush.msra.mxu0 0.0
        %725 = vmatpush.msra.mxu0 0.0
        %726 = vmatpush.msra.mxu0 0.0
        %727 = vmatpush.msra.mxu0 0.0
        %728 = vmatpush.msra.mxu0 0.0
        %729 = vmatpush.msra.mxu0 0.0
        %730 = vmatpush.msra.mxu0 0.0
        %731 = vmatpush.msra.mxu0 0.0
        %732 = vmatpush.msra.mxu0 0.0
        %733 = vmatpush.msra.mxu0 0.0
        %734 = vmatpush.msra.mxu0 0.0
        %735 = vmatpush.msra.mxu0 0.0
        %736 = vmatpush.msra.mxu0 0.0
        %v737 = vand.u32 %v285, 4294901760
        %v738 = vsub.f32 %v285, %v737
        %v739 = vand.u32 %v738, 4294901760
        %740 = vmatpush.msra.mxu0 %v739
        %v741 = vand.u32 %v284, 4294901760
        %v742 = vsub.f32 %v284, %v741
        %v743 = vand.u32 %v742, 4294901760
        %744 = vmatpush.msra.mxu0 %v743
        %v745 = vand.u32 %v291, 4294901760
        %746 = vmatmul.f32.gmra.mxu0 %v745
        %v747 = vpop.f32.mrf.mxu0
        %v748 = vadd.f32 %v721, %v747
        %749 = vdwg.mxu0
        %750 = vmatpush.msra.mxu0 0.0
        %751 = vmatpush.msra.mxu0 0.0
        %752 = vmatpush.msra.mxu0 0.0
        %753 = vmatpush.msra.mxu0 0.0
        %754 = vmatpush.msra.mxu0 0.0
        %755 = vmatpush.msra.mxu0 0.0
        %756 = vmatpush.msra.mxu0 0.0
        %757 = vmatpush.msra.mxu0 0.0
        %758 = vmatpush.msra.mxu0 0.0
        %759 = vmatpush.msra.mxu0 0.0
        %760 = vmatpush.msra.mxu0 0.0
        %761 = vmatpush.msra.mxu0 0.0
        %762 = vmatpush.msra.mxu0 0.0
        %763 = vmatpush.msra.mxu0 0.0
        %v764 = vand.u32 %v285, 4294901760
        %765 = vmatpush.msra.mxu0 %v764
        %v766 = vand.u32 %v284, 4294901760
        %767 = vmatpush.msra.mxu0 %v766
        %v768 = vand.u32 %v291, 4294901760
        %769 = vmatmul.f32.gmra.mxu0 %v768
        %v770 = vpop.f32.mrf.mxu0
        %v771 = vadd.f32 %v748, %v770
        %772 = vdwg.mxu0
        %v774 = vsel %vm289, %v771, 0
        %776 = vmatpush.msra.mxu0 0.0
        %777 = vmatpush.msra.mxu0 0.0
        %778 = vmatpush.msra.mxu0 0.0
        %779 = vmatpush.msra.mxu0 0.0
        %780 = vmatpush.msra.mxu0 0.0
        %781 = vmatpush.msra.mxu0 0.0
        %782 = vmatpush.msra.mxu0 0.0
        %783 = vmatpush.msra.mxu0 0.0
        %784 = vmatpush.msra.mxu0 0.0
        %785 = vmatpush.msra.mxu0 0.0
        %786 = vmatpush.msra.mxu0 0.0
        %787 = vmatpush.msra.mxu0 0.0
        %788 = vmatpush.msra.mxu0 0.0
        %789 = vmatpush.msra.mxu0 0.0
        %v790 = vand.u32 %v288, 4294901760
        %791 = vmatpush.msra.mxu0 %v790
        %v792 = vand.u32 %v287, 4294901760
        %793 = vmatpush.msra.mxu0 %v792
        %v794 = vand.u32 %v774, 4294901760
        %v795 = vsub.f32 %v774, %v794
        %v796 = vand.u32 %v795, 4294901760
        %v797 = vsub.f32 %v795, %v796
        %v798 = vand.u32 %v797, 4294901760
        %799 = vmatmul.f32.gmra.mxu0 %v798
        %v800 = vpop.f32.mrf.mxu0
        %v801 = vadd.f32 0.0, %v800
        %802 = vdwg.mxu0
        %803 = vmatpush.msra.mxu0 0.0
        %804 = vmatpush.msra.mxu0 0.0
        %805 = vmatpush.msra.mxu0 0.0
        %806 = vmatpush.msra.mxu0 0.0
        %807 = vmatpush.msra.mxu0 0.0
        %808 = vmatpush.msra.mxu0 0.0
        %809 = vmatpush.msra.mxu0 0.0
        %810 = vmatpush.msra.mxu0 0.0
        %811 = vmatpush.msra.mxu0 0.0
        %812 = vmatpush.msra.mxu0 0.0
        %813 = vmatpush.msra.mxu0 0.0
        %814 = vmatpush.msra.mxu0 0.0
        %815 = vmatpush.msra.mxu0 0.0
        %816 = vmatpush.msra.mxu0 0.0
        %v817 = vand.u32 %v288, 4294901760
        %v818 = vsub.f32 %v288, %v817
        %v819 = vand.u32 %v818, 4294901760
        %v820 = vsub.f32 %v818, %v819
        %v821 = vand.u32 %v820, 4294901760
        %822 = vmatpush.msra.mxu0 %v821
        %v823 = vand.u32 %v287, 4294901760
        %v824 = vsub.f32 %v287, %v823
        %v825 = vand.u32 %v824, 4294901760
        %v826 = vsub.f32 %v824, %v825
        %v827 = vand.u32 %v826, 4294901760
        %828 = vmatpush.msra.mxu0 %v827
        %v829 = vand.u32 %v774, 4294901760
        %830 = vmatmul.f32.gmra.mxu0 %v829
        %v831 = vpop.f32.mrf.mxu0
        %v832 = vadd.f32 %v801, %v831
        %833 = vdwg.mxu0
        %834 = vmatpush.msra.mxu0 0.0
        %835 = vmatpush.msra.mxu0 0.0
        %836 = vmatpush.msra.mxu0 0.0
        %837 = vmatpush.msra.mxu0 0.0
        %838 = vmatpush.msra.mxu0 0.0
        %839 = vmatpush.msra.mxu0 0.0
        %840 = vmatpush.msra.mxu0 0.0
        %841 = vmatpush.msra.mxu0 0.0
        %842 = vmatpush.msra.mxu0 0.0
        %843 = vmatpush.msra.mxu0 0.0
        %844 = vmatpush.msra.mxu0 0.0
        %845 = vmatpush.msra.mxu0 0.0
        %846 = vmatpush.msra.mxu0 0.0
        %847 = vmatpush.msra.mxu0 0.0
        %v848 = vand.u32 %v288, 4294901760
        %v849 = vsub.f32 %v288, %v848
        %850 = vmatpush.msra.mxu0 %v849
        %v851 = vand.u32 %v287, 4294901760
        %v852 = vsub.f32 %v287, %v851
        %853 = vmatpush.msra.mxu0 %v852
        %v854 = vand.u32 %v774, 4294901760
        %v855 = vsub.f32 %v774, %v854
        %856 = vmatmul.f32.gmra.mxu0 %v855
        %v857 = vpop.f32.mrf.mxu0
        %v858 = vadd.f32 %v832, %v857
        %859 = vdwg.mxu0
        %860 = vmatpush.msra.mxu0 0.0
        %861 = vmatpush.msra.mxu0 0.0
        %862 = vmatpush.msra.mxu0 0.0
        %863 = vmatpush.msra.mxu0 0.0
        %864 = vmatpush.msra.mxu0 0.0
        %865 = vmatpush.msra.mxu0 0.0
        %866 = vmatpush.msra.mxu0 0.0
        %867 = vmatpush.msra.mxu0 0.0
        %868 = vmatpush.msra.mxu0 0.0
        %869 = vmatpush.msra.mxu0 0.0
        %870 = vmatpush.msra.mxu0 0.0
        %871 = vmatpush.msra.mxu0 0.0
        %872 = vmatpush.msra.mxu0 0.0
        %873 = vmatpush.msra.mxu0 0.0
        %v874 = vand.u32 %v288, 4294901760
        %875 = vmatpush.msra.mxu0 %v874
        %v876 = vand.u32 %v287, 4294901760
        %877 = vmatpush.msra.mxu0 %v876
        %v878 = vand.u32 %v774, 4294901760
        %v879 = vsub.f32 %v774, %v878
        %v880 = vand.u32 %v879, 4294901760
        %881 = vmatmul.f32.gmra.mxu0 %v880
        %v882 = vpop.f32.mrf.mxu0
        %v883 = vadd.f32 %v858, %v882
        %884 = vdwg.mxu0
        %885 = vmatpush.msra.mxu0 0.0
        %886 = vmatpush.msra.mxu0 0.0
        %887 = vmatpush.msra.mxu0 0.0
        %888 = vmatpush.msra.mxu0 0.0
        %889 = vmatpush.msra.mxu0 0.0
        %890 = vmatpush.msra.mxu0 0.0
        %891 = vmatpush.msra.mxu0 0.0
        %892 = vmatpush.msra.mxu0 0.0
        %893 = vmatpush.msra.mxu0 0.0
        %894 = vmatpush.msra.mxu0 0.0
        %895 = vmatpush.msra.mxu0 0.0
        %896 = vmatpush.msra.mxu0 0.0
        %897 = vmatpush.msra.mxu0 0.0
        %898 = vmatpush.msra.mxu0 0.0
        %v899 = vand.u32 %v288, 4294901760
        %v900 = vsub.f32 %v288, %v899
        %v901 = vand.u32 %v900, 4294901760
        %902 = vmatpush.msra.mxu0 %v901
        %v903 = vand.u32 %v287, 4294901760
        %v904 = vsub.f32 %v287, %v903
        %v905 = vand.u32 %v904, 4294901760
        %906 = vmatpush.msra.mxu0 %v905
        %v907 = vand.u32 %v774, 4294901760
        %908 = vmatmul.f32.gmra.mxu0 %v907
        %v909 = vpop.f32.mrf.mxu0
        %v910 = vadd.f32 %v883, %v909
        %911 = vdwg.mxu0
        %912 = vmatpush.msra.mxu0 0.0
        %913 = vmatpush.msra.mxu0 0.0
        %914 = vmatpush.msra.mxu0 0.0
        %915 = vmatpush.msra.mxu0 0.0
        %916 = vmatpush.msra.mxu0 0.0
        %917 = vmatpush.msra.mxu0 0.0
        %918 = vmatpush.msra.mxu0 0.0
        %919 = vmatpush.msra.mxu0 0.0
        %920 = vmatpush.msra.mxu0 0.0
        %921 = vmatpush.msra.mxu0 0.0
        %922 = vmatpush.msra.mxu0 0.0
        %923 = vmatpush.msra.mxu0 0.0
        %924 = vmatpush.msra.mxu0 0.0
        %925 = vmatpush.msra.mxu0 0.0
        %v926 = vand.u32 %v288, 4294901760
        %927 = vmatpush.msra.mxu0 %v926
        %v928 = vand.u32 %v287, 4294901760
        %929 = vmatpush.msra.mxu0 %v928
        %v930 = vand.u32 %v774, 4294901760
        %931 = vmatmul.f32.gmra.mxu0 %v930
        %v932 = vpop.f32.mrf.mxu0
        %v933 = vadd.f32 %v910, %v932
        %934 = vdwg.mxu0
        %v935 = vmul.f32 %v282, %v282
        %v936 = vmul.f32 %v283, %v283
        %937 = vmatpush.msra.mxu0 0.0
        %938 = vmatpush.msra.mxu0 0.0
        %939 = vmatpush.msra.mxu0 0.0
        %940 = vmatpush.msra.mxu0 0.0
        %941 = vmatpush.msra.mxu0 0.0
        %942 = vmatpush.msra.mxu0 0.0
        %943 = vmatpush.msra.mxu0 0.0
        %944 = vmatpush.msra.mxu0 0.0
        %945 = vmatpush.msra.mxu0 0.0
        %946 = vmatpush.msra.mxu0 0.0
        %947 = vmatpush.msra.mxu0 0.0
        %948 = vmatpush.msra.mxu0 0.0
        %949 = vmatpush.msra.mxu0 0.0
        %950 = vmatpush.msra.mxu0 0.0
        %v951 = vand.u32 %v936, 4294901760
        %952 = vmatpush.msra.mxu0 %v951
        %v953 = vand.u32 %v935, 4294901760
        %954 = vmatpush.msra.mxu0 %v953
        %v955 = vand.u32 %v291, 4294901760
        %v956 = vsub.f32 %v291, %v955
        %v957 = vand.u32 %v956, 4294901760
        %v958 = vsub.f32 %v956, %v957
        %v959 = vand.u32 %v958, 4294901760
        %960 = vmatmul.f32.gmra.mxu0 %v959
        %v961 = vpop.f32.mrf.mxu0
        %v962 = vadd.f32 0.0, %v961
        %963 = vdwg.mxu0
        %964 = vmatpush.msra.mxu0 0.0
        %965 = vmatpush.msra.mxu0 0.0
        %966 = vmatpush.msra.mxu0 0.0
        %967 = vmatpush.msra.mxu0 0.0
        %968 = vmatpush.msra.mxu0 0.0
        %969 = vmatpush.msra.mxu0 0.0
        %970 = vmatpush.msra.mxu0 0.0
        %971 = vmatpush.msra.mxu0 0.0
        %972 = vmatpush.msra.mxu0 0.0
        %973 = vmatpush.msra.mxu0 0.0
        %974 = vmatpush.msra.mxu0 0.0
        %975 = vmatpush.msra.mxu0 0.0
        %976 = vmatpush.msra.mxu0 0.0
        %977 = vmatpush.msra.mxu0 0.0
        %v978 = vand.u32 %v936, 4294901760
        %v979 = vsub.f32 %v936, %v978
        %v980 = vand.u32 %v979, 4294901760
        %v981 = vsub.f32 %v979, %v980
        %v982 = vand.u32 %v981, 4294901760
        %983 = vmatpush.msra.mxu0 %v982
        %v984 = vand.u32 %v935, 4294901760
        %v985 = vsub.f32 %v935, %v984
        %v986 = vand.u32 %v985, 4294901760
        %v987 = vsub.f32 %v985, %v986
        %v988 = vand.u32 %v987, 4294901760
        %989 = vmatpush.msra.mxu0 %v988
        %v990 = vand.u32 %v291, 4294901760
        %991 = vmatmul.f32.gmra.mxu0 %v990
        %v992 = vpop.f32.mrf.mxu0
        %v993 = vadd.f32 %v962, %v992
        %994 = vdwg.mxu0
        %995 = vmatpush.msra.mxu0 0.0
        %996 = vmatpush.msra.mxu0 0.0
        %997 = vmatpush.msra.mxu0 0.0
        %998 = vmatpush.msra.mxu0 0.0
        %999 = vmatpush.msra.mxu0 0.0
        %1000 = vmatpush.msra.mxu0 0.0
        %1001 = vmatpush.msra.mxu0 0.0
        %1002 = vmatpush.msra.mxu0 0.0
        %1003 = vmatpush.msra.mxu0 0.0
        %1004 = vmatpush.msra.mxu0 0.0
        %1005 = vmatpush.msra.mxu0 0.0
        %1006 = vmatpush.msra.mxu0 0.0
        %1007 = vmatpush.msra.mxu0 0.0
        %1008 = vmatpush.msra.mxu0 0.0
        %v1009 = vand.u32 %v936, 4294901760
        %v1010 = vsub.f32 %v936, %v1009
        %1011 = vmatpush.msra.mxu0 %v1010
        %v1012 = vand.u32 %v935, 4294901760
        %v1013 = vsub.f32 %v935, %v1012
        %1014 = vmatpush.msra.mxu0 %v1013
        %v1015 = vand.u32 %v291, 4294901760
        %v1016 = vsub.f32 %v291, %v1015
        %1017 = vmatmul.f32.gmra.mxu0 %v1016
        %v1018 = vpop.f32.mrf.mxu0
        %v1019 = vadd.f32 %v993, %v1018
        %1020 = vdwg.mxu0
        %1021 = vmatpush.msra.mxu0 0.0
        %1022 = vmatpush.msra.mxu0 0.0
        %1023 = vmatpush.msra.mxu0 0.0
        %1024 = vmatpush.msra.mxu0 0.0
        %1025 = vmatpush.msra.mxu0 0.0
        %1026 = vmatpush.msra.mxu0 0.0
        %1027 = vmatpush.msra.mxu0 0.0
        %1028 = vmatpush.msra.mxu0 0.0
        %1029 = vmatpush.msra.mxu0 0.0
        %1030 = vmatpush.msra.mxu0 0.0
        %1031 = vmatpush.msra.mxu0 0.0
        %1032 = vmatpush.msra.mxu0 0.0
        %1033 = vmatpush.msra.mxu0 0.0
        %1034 = vmatpush.msra.mxu0 0.0
        %v1035 = vand.u32 %v936, 4294901760
        %1036 = vmatpush.msra.mxu0 %v1035
        %v1037 = vand.u32 %v935, 4294901760
        %1038 = vmatpush.msra.mxu0 %v1037
        %v1039 = vand.u32 %v291, 4294901760
        %v1040 = vsub.f32 %v291, %v1039
        %v1041 = vand.u32 %v1040, 4294901760
        %1042 = vmatmul.f32.gmra.mxu0 %v1041
        %v1043 = vpop.f32.mrf.mxu0
        %v1044 = vadd.f32 %v1019, %v1043
        %1045 = vdwg.mxu0
        %1046 = vmatpush.msra.mxu0 0.0
        %1047 = vmatpush.msra.mxu0 0.0
        %1048 = vmatpush.msra.mxu0 0.0
        %1049 = vmatpush.msra.mxu0 0.0
        %1050 = vmatpush.msra.mxu0 0.0
        %1051 = vmatpush.msra.mxu0 0.0
        %1052 = vmatpush.msra.mxu0 0.0
        %1053 = vmatpush.msra.mxu0 0.0
        %1054 = vmatpush.msra.mxu0 0.0
        %1055 = vmatpush.msra.mxu0 0.0
        %1056 = vmatpush.msra.mxu0 0.0
        %1057 = vmatpush.msra.mxu0 0.0
        %1058 = vmatpush.msra.mxu0 0.0
        %1059 = vmatpush.msra.mxu0 0.0
        %v1060 = vand.u32 %v936, 4294901760
        %v1061 = vsub.f32 %v936, %v1060
        %v1062 = vand.u32 %v1061, 4294901760
        %1063 = vmatpush.msra.mxu0 %v1062
        %v1064 = vand.u32 %v935, 4294901760
        %v1065 = vsub.f32 %v935, %v1064
        %v1066 = vand.u32 %v1065, 4294901760
        %1067 = vmatpush.msra.mxu0 %v1066
        %v1068 = vand.u32 %v291, 4294901760
        %1069 = vmatmul.f32.gmra.mxu0 %v1068
        %v1070 = vpop.f32.mrf.mxu0
        %v1071 = vadd.f32 %v1044, %v1070
        %1072 = vdwg.mxu0
        %1073 = vmatpush.msra.mxu0 0.0
        %1074 = vmatpush.msra.mxu0 0.0
        %1075 = vmatpush.msra.mxu0 0.0
        %1076 = vmatpush.msra.mxu0 0.0
        %1077 = vmatpush.msra.mxu0 0.0
        %1078 = vmatpush.msra.mxu0 0.0
        %1079 = vmatpush.msra.mxu0 0.0
        %1080 = vmatpush.msra.mxu0 0.0
        %1081 = vmatpush.msra.mxu0 0.0
        %1082 = vmatpush.msra.mxu0 0.0
        %1083 = vmatpush.msra.mxu0 0.0
        %1084 = vmatpush.msra.mxu0 0.0
        %1085 = vmatpush.msra.mxu0 0.0
        %1086 = vmatpush.msra.mxu0 0.0
        %v1087 = vand.u32 %v936, 4294901760
        %1088 = vmatpush.msra.mxu0 %v1087
        %v1089 = vand.u32 %v935, 4294901760
        %1090 = vmatpush.msra.mxu0 %v1089
        %v1091 = vand.u32 %v291, 4294901760
        %1092 = vmatmul.f32.gmra.mxu0 %v1091
        %v1093 = vpop.f32.mrf.mxu0
        %v1094 = vadd.f32 %v1071, %v1093
        %1095 = vdwg.mxu0
        %v1097 = vsel %vm289, %v1094, 0
        %1099 = vmatpush.msra.mxu0 0.0
        %1100 = vmatpush.msra.mxu0 0.0
        %1101 = vmatpush.msra.mxu0 0.0
        %1102 = vmatpush.msra.mxu0 0.0
        %1103 = vmatpush.msra.mxu0 0.0
        %1104 = vmatpush.msra.mxu0 0.0
        %1105 = vmatpush.msra.mxu0 0.0
        %1106 = vmatpush.msra.mxu0 0.0
        %1107 = vmatpush.msra.mxu0 0.0
        %1108 = vmatpush.msra.mxu0 0.0
        %1109 = vmatpush.msra.mxu0 0.0
        %1110 = vmatpush.msra.mxu0 0.0
        %1111 = vmatpush.msra.mxu0 0.0
        %1112 = vmatpush.msra.mxu0 0.0
        %v1113 = vand.u32 %v288, 4294901760
        %1114 = vmatpush.msra.mxu0 %v1113
        %v1115 = vand.u32 %v287, 4294901760
        %1116 = vmatpush.msra.mxu0 %v1115
        %v1117 = vand.u32 %v1097, 4294901760
        %v1118 = vsub.f32 %v1097, %v1117
        %v1119 = vand.u32 %v1118, 4294901760
        %v1120 = vsub.f32 %v1118, %v1119
        %v1121 = vand.u32 %v1120, 4294901760
        %1122 = vmatmul.f32.gmra.mxu0 %v1121
        %v1123 = vpop.f32.mrf.mxu0
        %v1124 = vadd.f32 0.0, %v1123
        %1125 = vdwg.mxu0
        %1126 = vmatpush.msra.mxu0 0.0
        %1127 = vmatpush.msra.mxu0 0.0
        %1128 = vmatpush.msra.mxu0 0.0
        %1129 = vmatpush.msra.mxu0 0.0
        %1130 = vmatpush.msra.mxu0 0.0
        %1131 = vmatpush.msra.mxu0 0.0
        %1132 = vmatpush.msra.mxu0 0.0
        %1133 = vmatpush.msra.mxu0 0.0
        %1134 = vmatpush.msra.mxu0 0.0
        %1135 = vmatpush.msra.mxu0 0.0
        %1136 = vmatpush.msra.mxu0 0.0
        %1137 = vmatpush.msra.mxu0 0.0
        %1138 = vmatpush.msra.mxu0 0.0
        %1139 = vmatpush.msra.mxu0 0.0
        %v1140 = vand.u32 %v288, 4294901760
        %v1141 = vsub.f32 %v288, %v1140
        %v1142 = vand.u32 %v1141, 4294901760
        %v1143 = vsub.f32 %v1141, %v1142
        %v1144 = vand.u32 %v1143, 4294901760
        %1145 = vmatpush.msra.mxu0 %v1144
        %v1146 = vand.u32 %v287, 4294901760
        %v1147 = vsub.f32 %v287, %v1146
        %v1148 = vand.u32 %v1147, 4294901760
        %v1149 = vsub.f32 %v1147, %v1148
        %v1150 = vand.u32 %v1149, 4294901760
        %1151 = vmatpush.msra.mxu0 %v1150
        %v1152 = vand.u32 %v1097, 4294901760
        %1153 = vmatmul.f32.gmra.mxu0 %v1152
        %v1154 = vpop.f32.mrf.mxu0
        %v1155 = vadd.f32 %v1124, %v1154
        %1156 = vdwg.mxu0
        %1157 = vmatpush.msra.mxu0 0.0
        %1158 = vmatpush.msra.mxu0 0.0
        %1159 = vmatpush.msra.mxu0 0.0
        %1160 = vmatpush.msra.mxu0 0.0
        %1161 = vmatpush.msra.mxu0 0.0
        %1162 = vmatpush.msra.mxu0 0.0
        %1163 = vmatpush.msra.mxu0 0.0
        %1164 = vmatpush.msra.mxu0 0.0
        %1165 = vmatpush.msra.mxu0 0.0
        %1166 = vmatpush.msra.mxu0 0.0
        %1167 = vmatpush.msra.mxu0 0.0
        %1168 = vmatpush.msra.mxu0 0.0
        %1169 = vmatpush.msra.mxu0 0.0
        %1170 = vmatpush.msra.mxu0 0.0
        %v1171 = vand.u32 %v288, 4294901760
        %v1172 = vsub.f32 %v288, %v1171
        %1173 = vmatpush.msra.mxu0 %v1172
        %v1174 = vand.u32 %v287, 4294901760
        %v1175 = vsub.f32 %v287, %v1174
        %1176 = vmatpush.msra.mxu0 %v1175
        %v1177 = vand.u32 %v1097, 4294901760
        %v1178 = vsub.f32 %v1097, %v1177
        %1179 = vmatmul.f32.gmra.mxu0 %v1178
        %v1180 = vpop.f32.mrf.mxu0
        %v1181 = vadd.f32 %v1155, %v1180
        %1182 = vdwg.mxu0
        %1183 = vmatpush.msra.mxu0 0.0
        %1184 = vmatpush.msra.mxu0 0.0
        %1185 = vmatpush.msra.mxu0 0.0
        %1186 = vmatpush.msra.mxu0 0.0
        %1187 = vmatpush.msra.mxu0 0.0
        %1188 = vmatpush.msra.mxu0 0.0
        %1189 = vmatpush.msra.mxu0 0.0
        %1190 = vmatpush.msra.mxu0 0.0
        %1191 = vmatpush.msra.mxu0 0.0
        %1192 = vmatpush.msra.mxu0 0.0
        %1193 = vmatpush.msra.mxu0 0.0
        %1194 = vmatpush.msra.mxu0 0.0
        %1195 = vmatpush.msra.mxu0 0.0
        %1196 = vmatpush.msra.mxu0 0.0
        %v1197 = vand.u32 %v288, 4294901760
        %1198 = vmatpush.msra.mxu0 %v1197
        %v1199 = vand.u32 %v287, 4294901760
        %1200 = vmatpush.msra.mxu0 %v1199
        %v1201 = vand.u32 %v1097, 4294901760
        %v1202 = vsub.f32 %v1097, %v1201
        %v1203 = vand.u32 %v1202, 4294901760
        %1204 = vmatmul.f32.gmra.mxu0 %v1203
        %v1205 = vpop.f32.mrf.mxu0
        %v1206 = vadd.f32 %v1181, %v1205
        %1207 = vdwg.mxu0
        %1208 = vmatpush.msra.mxu0 0.0
        %1209 = vmatpush.msra.mxu0 0.0
        %1210 = vmatpush.msra.mxu0 0.0
        %1211 = vmatpush.msra.mxu0 0.0
        %1212 = vmatpush.msra.mxu0 0.0
        %1213 = vmatpush.msra.mxu0 0.0
        %1214 = vmatpush.msra.mxu0 0.0
        %1215 = vmatpush.msra.mxu0 0.0
        %1216 = vmatpush.msra.mxu0 0.0
        %1217 = vmatpush.msra.mxu0 0.0
        %1218 = vmatpush.msra.mxu0 0.0
        %1219 = vmatpush.msra.mxu0 0.0
        %1220 = vmatpush.msra.mxu0 0.0
        %1221 = vmatpush.msra.mxu0 0.0
        %v1222 = vand.u32 %v288, 4294901760
        %v1223 = vsub.f32 %v288, %v1222
        %v1224 = vand.u32 %v1223, 4294901760
        %1225 = vmatpush.msra.mxu0 %v1224
        %v1226 = vand.u32 %v287, 4294901760
        %v1227 = vsub.f32 %v287, %v1226
        %v1228 = vand.u32 %v1227, 4294901760
        %1229 = vmatpush.msra.mxu0 %v1228
        %v1230 = vand.u32 %v1097, 4294901760
        %1231 = vmatmul.f32.gmra.mxu0 %v1230
        %v1232 = vpop.f32.mrf.mxu0
        %v1233 = vadd.f32 %v1206, %v1232
        %1234 = vdwg.mxu0
        %1235 = vmatpush.msra.mxu0 0.0
        %1236 = vmatpush.msra.mxu0 0.0
        %1237 = vmatpush.msra.mxu0 0.0
        %1238 = vmatpush.msra.mxu0 0.0
        %1239 = vmatpush.msra.mxu0 0.0
        %1240 = vmatpush.msra.mxu0 0.0
        %1241 = vmatpush.msra.mxu0 0.0
        %1242 = vmatpush.msra.mxu0 0.0
        %1243 = vmatpush.msra.mxu0 0.0
        %1244 = vmatpush.msra.mxu0 0.0
        %1245 = vmatpush.msra.mxu0 0.0
        %1246 = vmatpush.msra.mxu0 0.0
        %1247 = vmatpush.msra.mxu0 0.0
        %1248 = vmatpush.msra.mxu0 0.0
        %v1249 = vand.u32 %v288, 4294901760
        %1250 = vmatpush.msra.mxu0 %v1249
        %v1251 = vand.u32 %v287, 4294901760
        %1252 = vmatpush.msra.mxu0 %v1251
        %v1253 = vand.u32 %v1097, 4294901760
        %1254 = vmatmul.f32.gmra.mxu0 %v1253
        %v1255 = vpop.f32.mrf.mxu0
        %v1256 = vadd.f32 %v1233, %v1255
        %1257 = vdwg.mxu0
        %v1258 = vmul.f32 %v284, %v284
        %v1259 = vmul.f32 %v285, %v285
        %1260 = vmatpush.msra.mxu0 0.0
        %1261 = vmatpush.msra.mxu0 0.0
        %1262 = vmatpush.msra.mxu0 0.0
        %1263 = vmatpush.msra.mxu0 0.0
        %1264 = vmatpush.msra.mxu0 0.0
        %1265 = vmatpush.msra.mxu0 0.0
        %1266 = vmatpush.msra.mxu0 0.0
        %1267 = vmatpush.msra.mxu0 0.0
        %1268 = vmatpush.msra.mxu0 0.0
        %1269 = vmatpush.msra.mxu0 0.0
        %1270 = vmatpush.msra.mxu0 0.0
        %1271 = vmatpush.msra.mxu0 0.0
        %1272 = vmatpush.msra.mxu0 0.0
        %1273 = vmatpush.msra.mxu0 0.0
        %v1274 = vand.u32 %v1259, 4294901760
        %1275 = vmatpush.msra.mxu0 %v1274
        %v1276 = vand.u32 %v1258, 4294901760
        %1277 = vmatpush.msra.mxu0 %v1276
        %v1278 = vand.u32 %v291, 4294901760
        %v1279 = vsub.f32 %v291, %v1278
        %v1280 = vand.u32 %v1279, 4294901760
        %v1281 = vsub.f32 %v1279, %v1280
        %v1282 = vand.u32 %v1281, 4294901760
        %1283 = vmatmul.f32.gmra.mxu0 %v1282
        %v1284 = vpop.f32.mrf.mxu0
        %v1285 = vadd.f32 0.0, %v1284
        %1286 = vdwg.mxu0
        %1287 = vmatpush.msra.mxu0 0.0
        %1288 = vmatpush.msra.mxu0 0.0
        %1289 = vmatpush.msra.mxu0 0.0
        %1290 = vmatpush.msra.mxu0 0.0
        %1291 = vmatpush.msra.mxu0 0.0
        %1292 = vmatpush.msra.mxu0 0.0
        %1293 = vmatpush.msra.mxu0 0.0
        %1294 = vmatpush.msra.mxu0 0.0
        %1295 = vmatpush.msra.mxu0 0.0
        %1296 = vmatpush.msra.mxu0 0.0
        %1297 = vmatpush.msra.mxu0 0.0
        %1298 = vmatpush.msra.mxu0 0.0
        %1299 = vmatpush.msra.mxu0 0.0
        %1300 = vmatpush.msra.mxu0 0.0
        %v1301 = vand.u32 %v1259, 4294901760
        %v1302 = vsub.f32 %v1259, %v1301
        %v1303 = vand.u32 %v1302, 4294901760
        %v1304 = vsub.f32 %v1302, %v1303
        %v1305 = vand.u32 %v1304, 4294901760
        %1306 = vmatpush.msra.mxu0 %v1305
        %v1307 = vand.u32 %v1258, 4294901760
        %v1308 = vsub.f32 %v1258, %v1307
        %v1309 = vand.u32 %v1308, 4294901760
        %v1310 = vsub.f32 %v1308, %v1309
        %v1311 = vand.u32 %v1310, 4294901760
        %1312 = vmatpush.msra.mxu0 %v1311
        %v1313 = vand.u32 %v291, 4294901760
        %1314 = vmatmul.f32.gmra.mxu0 %v1313
        %v1315 = vpop.f32.mrf.mxu0
        %v1316 = vadd.f32 %v1285, %v1315
        %1317 = vdwg.mxu0
        %1318 = vmatpush.msra.mxu0 0.0
        %1319 = vmatpush.msra.mxu0 0.0
        %1320 = vmatpush.msra.mxu0 0.0
        %1321 = vmatpush.msra.mxu0 0.0
        %1322 = vmatpush.msra.mxu0 0.0
        %1323 = vmatpush.msra.mxu0 0.0
        %1324 = vmatpush.msra.mxu0 0.0
        %1325 = vmatpush.msra.mxu0 0.0
        %1326 = vmatpush.msra.mxu0 0.0
        %1327 = vmatpush.msra.mxu0 0.0
        %1328 = vmatpush.msra.mxu0 0.0
        %1329 = vmatpush.msra.mxu0 0.0
        %1330 = vmatpush.msra.mxu0 0.0
        %1331 = vmatpush.msra.mxu0 0.0
        %v1332 = vand.u32 %v1259, 4294901760
        %v1333 = vsub.f32 %v1259, %v1332
        %1334 = vmatpush.msra.mxu0 %v1333
        %v1335 = vand.u32 %v1258, 4294901760
        %v1336 = vsub.f32 %v1258, %v1335
        %1337 = vmatpush.msra.mxu0 %v1336
        %v1338 = vand.u32 %v291, 4294901760
        %v1339 = vsub.f32 %v291, %v1338
        %1340 = vmatmul.f32.gmra.mxu0 %v1339
        %v1341 = vpop.f32.mrf.mxu0
        %v1342 = vadd.f32 %v1316, %v1341
        %1343 = vdwg.mxu0
        %1344 = vmatpush.msra.mxu0 0.0
        %1345 = vmatpush.msra.mxu0 0.0
        %1346 = vmatpush.msra.mxu0 0.0
        %1347 = vmatpush.msra.mxu0 0.0
        %1348 = vmatpush.msra.mxu0 0.0
        %1349 = vmatpush.msra.mxu0 0.0
        %1350 = vmatpush.msra.mxu0 0.0
        %1351 = vmatpush.msra.mxu0 0.0
        %1352 = vmatpush.msra.mxu0 0.0
        %1353 = vmatpush.msra.mxu0 0.0
        %1354 = vmatpush.msra.mxu0 0.0
        %1355 = vmatpush.msra.mxu0 0.0
        %1356 = vmatpush.msra.mxu0 0.0
        %1357 = vmatpush.msra.mxu0 0.0
        %v1358 = vand.u32 %v1259, 4294901760
        %1359 = vmatpush.msra.mxu0 %v1358
        %v1360 = vand.u32 %v1258, 4294901760
        %1361 = vmatpush.msra.mxu0 %v1360
        %v1362 = vand.u32 %v291, 4294901760
        %v1363 = vsub.f32 %v291, %v1362
        %v1364 = vand.u32 %v1363, 4294901760
        %1365 = vmatmul.f32.gmra.mxu0 %v1364
        %v1366 = vpop.f32.mrf.mxu0
        %v1367 = vadd.f32 %v1342, %v1366
        %1368 = vdwg.mxu0
        %1369 = vmatpush.msra.mxu0 0.0
        %1370 = vmatpush.msra.mxu0 0.0
        %1371 = vmatpush.msra.mxu0 0.0
        %1372 = vmatpush.msra.mxu0 0.0
        %1373 = vmatpush.msra.mxu0 0.0
        %1374 = vmatpush.msra.mxu0 0.0
        %1375 = vmatpush.msra.mxu0 0.0
        %1376 = vmatpush.msra.mxu0 0.0
        %1377 = vmatpush.msra.mxu0 0.0
        %1378 = vmatpush.msra.mxu0 0.0
        %1379 = vmatpush.msra.mxu0 0.0
        %1380 = vmatpush.msra.mxu0 0.0
        %1381 = vmatpush.msra.mxu0 0.0
        %1382 = vmatpush.msra.mxu0 0.0
        %v1383 = vand.u32 %v1259, 4294901760
        %v1384 = vsub.f32 %v1259, %v1383
        %v1385 = vand.u32 %v1384, 4294901760
        %1386 = vmatpush.msra.mxu0 %v1385
        %v1387 = vand.u32 %v1258, 4294901760
        %v1388 = vsub.f32 %v1258, %v1387
        %v1389 = vand.u32 %v1388, 4294901760
        %1390 = vmatpush.msra.mxu0 %v1389
        %v1391 = vand.u32 %v291, 4294901760
        %1392 = vmatmul.f32.gmra.mxu0 %v1391
        %v1393 = vpop.f32.mrf.mxu0
        %v1394 = vadd.f32 %v1367, %v1393
        %1395 = vdwg.mxu0
        %1396 = vmatpush.msra.mxu0 0.0
        %1397 = vmatpush.msra.mxu0 0.0
        %1398 = vmatpush.msra.mxu0 0.0
        %1399 = vmatpush.msra.mxu0 0.0
        %1400 = vmatpush.msra.mxu0 0.0
        %1401 = vmatpush.msra.mxu0 0.0
        %1402 = vmatpush.msra.mxu0 0.0
        %1403 = vmatpush.msra.mxu0 0.0
        %1404 = vmatpush.msra.mxu0 0.0
        %1405 = vmatpush.msra.mxu0 0.0
        %1406 = vmatpush.msra.mxu0 0.0
        %1407 = vmatpush.msra.mxu0 0.0
        %1408 = vmatpush.msra.mxu0 0.0
        %1409 = vmatpush.msra.mxu0 0.0
        %v1410 = vand.u32 %v1259, 4294901760
        %1411 = vmatpush.msra.mxu0 %v1410
        %v1412 = vand.u32 %v1258, 4294901760
        %1413 = vmatpush.msra.mxu0 %v1412
        %v1414 = vand.u32 %v291, 4294901760
        %1415 = vmatmul.f32.gmra.mxu0 %v1414
        %v1416 = vpop.f32.mrf.mxu0
        %v1417 = vadd.f32 %v1394, %v1416
        %1418 = vdwg.mxu0
        %v1420 = vsel %vm289, %v1417, 0
        %1422 = vmatpush.msra.mxu0 0.0
        %1423 = vmatpush.msra.mxu0 0.0
        %1424 = vmatpush.msra.mxu0 0.0
        %1425 = vmatpush.msra.mxu0 0.0
        %1426 = vmatpush.msra.mxu0 0.0
        %1427 = vmatpush.msra.mxu0 0.0
        %1428 = vmatpush.msra.mxu0 0.0
        %1429 = vmatpush.msra.mxu0 0.0
        %1430 = vmatpush.msra.mxu0 0.0
        %1431 = vmatpush.msra.mxu0 0.0
        %1432 = vmatpush.msra.mxu0 0.0
        %1433 = vmatpush.msra.mxu0 0.0
        %1434 = vmatpush.msra.mxu0 0.0
        %1435 = vmatpush.msra.mxu0 0.0
        %v1436 = vand.u32 %v288, 4294901760
        %1437 = vmatpush.msra.mxu0 %v1436
        %v1438 = vand.u32 %v287, 4294901760
        %1439 = vmatpush.msra.mxu0 %v1438
        %v1440 = vand.u32 %v1420, 4294901760
        %v1441 = vsub.f32 %v1420, %v1440
        %v1442 = vand.u32 %v1441, 4294901760
        %v1443 = vsub.f32 %v1441, %v1442
        %v1444 = vand.u32 %v1443, 4294901760
        %1445 = vmatmul.f32.gmra.mxu0 %v1444
        %v1446 = vpop.f32.mrf.mxu0
        %v1447 = vadd.f32 0.0, %v1446
        %1448 = vdwg.mxu0
        %1449 = vmatpush.msra.mxu0 0.0
        %1450 = vmatpush.msra.mxu0 0.0
        %1451 = vmatpush.msra.mxu0 0.0
        %1452 = vmatpush.msra.mxu0 0.0
        %1453 = vmatpush.msra.mxu0 0.0
        %1454 = vmatpush.msra.mxu0 0.0
        %1455 = vmatpush.msra.mxu0 0.0
        %1456 = vmatpush.msra.mxu0 0.0
        %1457 = vmatpush.msra.mxu0 0.0
        %1458 = vmatpush.msra.mxu0 0.0
        %1459 = vmatpush.msra.mxu0 0.0
        %1460 = vmatpush.msra.mxu0 0.0
        %1461 = vmatpush.msra.mxu0 0.0
        %1462 = vmatpush.msra.mxu0 0.0
        %v1463 = vand.u32 %v288, 4294901760
        %v1464 = vsub.f32 %v288, %v1463
        %v1465 = vand.u32 %v1464, 4294901760
        %v1466 = vsub.f32 %v1464, %v1465
        %v1467 = vand.u32 %v1466, 4294901760
        %1468 = vmatpush.msra.mxu0 %v1467
        %v1469 = vand.u32 %v287, 4294901760
        %v1470 = vsub.f32 %v287, %v1469
        %v1471 = vand.u32 %v1470, 4294901760
        %v1472 = vsub.f32 %v1470, %v1471
        %v1473 = vand.u32 %v1472, 4294901760
        %1474 = vmatpush.msra.mxu0 %v1473
        %v1475 = vand.u32 %v1420, 4294901760
        %1476 = vmatmul.f32.gmra.mxu0 %v1475
        %v1477 = vpop.f32.mrf.mxu0
        %v1478 = vadd.f32 %v1447, %v1477
        %1479 = vdwg.mxu0
        %1480 = vmatpush.msra.mxu0 0.0
        %1481 = vmatpush.msra.mxu0 0.0
        %1482 = vmatpush.msra.mxu0 0.0
        %1483 = vmatpush.msra.mxu0 0.0
        %1484 = vmatpush.msra.mxu0 0.0
        %1485 = vmatpush.msra.mxu0 0.0
        %1486 = vmatpush.msra.mxu0 0.0
        %1487 = vmatpush.msra.mxu0 0.0
        %1488 = vmatpush.msra.mxu0 0.0
        %1489 = vmatpush.msra.mxu0 0.0
        %1490 = vmatpush.msra.mxu0 0.0
        %1491 = vmatpush.msra.mxu0 0.0
        %1492 = vmatpush.msra.mxu0 0.0
        %1493 = vmatpush.msra.mxu0 0.0
        %v1494 = vand.u32 %v288, 4294901760
        %v1495 = vsub.f32 %v288, %v1494
        %1496 = vmatpush.msra.mxu0 %v1495
        %v1497 = vand.u32 %v287, 4294901760
        %v1498 = vsub.f32 %v287, %v1497
        %1499 = vmatpush.msra.mxu0 %v1498
        %v1500 = vand.u32 %v1420, 4294901760
        %v1501 = vsub.f32 %v1420, %v1500
        %1502 = vmatmul.f32.gmra.mxu0 %v1501
        %v1503 = vpop.f32.mrf.mxu0
        %v1504 = vadd.f32 %v1478, %v1503
        %1505 = vdwg.mxu0
        %1506 = vmatpush.msra.mxu0 0.0
        %1507 = vmatpush.msra.mxu0 0.0
        %1508 = vmatpush.msra.mxu0 0.0
        %1509 = vmatpush.msra.mxu0 0.0
        %1510 = vmatpush.msra.mxu0 0.0
        %1511 = vmatpush.msra.mxu0 0.0
        %1512 = vmatpush.msra.mxu0 0.0
        %1513 = vmatpush.msra.mxu0 0.0
        %1514 = vmatpush.msra.mxu0 0.0
        %1515 = vmatpush.msra.mxu0 0.0
        %1516 = vmatpush.msra.mxu0 0.0
        %1517 = vmatpush.msra.mxu0 0.0
        %1518 = vmatpush.msra.mxu0 0.0
        %1519 = vmatpush.msra.mxu0 0.0
        %v1520 = vand.u32 %v288, 4294901760
        %1521 = vmatpush.msra.mxu0 %v1520
        %v1522 = vand.u32 %v287, 4294901760
        %1523 = vmatpush.msra.mxu0 %v1522
        %v1524 = vand.u32 %v1420, 4294901760
        %v1525 = vsub.f32 %v1420, %v1524
        %v1526 = vand.u32 %v1525, 4294901760
        %1527 = vmatmul.f32.gmra.mxu0 %v1526
        %v1528 = vpop.f32.mrf.mxu0
        %v1529 = vadd.f32 %v1504, %v1528
        %1530 = vdwg.mxu0
        %1531 = vmatpush.msra.mxu0 0.0
        %1532 = vmatpush.msra.mxu0 0.0
        %1533 = vmatpush.msra.mxu0 0.0
        %1534 = vmatpush.msra.mxu0 0.0
        %1535 = vmatpush.msra.mxu0 0.0
        %1536 = vmatpush.msra.mxu0 0.0
        %1537 = vmatpush.msra.mxu0 0.0
        %1538 = vmatpush.msra.mxu0 0.0
        %1539 = vmatpush.msra.mxu0 0.0
        %1540 = vmatpush.msra.mxu0 0.0
        %1541 = vmatpush.msra.mxu0 0.0
        %1542 = vmatpush.msra.mxu0 0.0
        %1543 = vmatpush.msra.mxu0 0.0
        %1544 = vmatpush.msra.mxu0 0.0
        %v1545 = vand.u32 %v288, 4294901760
        %v1546 = vsub.f32 %v288, %v1545
        %v1547 = vand.u32 %v1546, 4294901760
        %1548 = vmatpush.msra.mxu0 %v1547
        %v1549 = vand.u32 %v287, 4294901760
        %v1550 = vsub.f32 %v287, %v1549
        %v1551 = vand.u32 %v1550, 4294901760
        %1552 = vmatpush.msra.mxu0 %v1551
        %v1553 = vand.u32 %v1420, 4294901760
        %1554 = vmatmul.f32.gmra.mxu0 %v1553
        %v1555 = vpop.f32.mrf.mxu0
        %v1556 = vadd.f32 %v1529, %v1555
        %1557 = vdwg.mxu0
        %1558 = vmatpush.msra.mxu0 0.0
        %1559 = vmatpush.msra.mxu0 0.0
        %1560 = vmatpush.msra.mxu0 0.0
        %1561 = vmatpush.msra.mxu0 0.0
        %1562 = vmatpush.msra.mxu0 0.0
        %1563 = vmatpush.msra.mxu0 0.0
        %1564 = vmatpush.msra.mxu0 0.0
        %1565 = vmatpush.msra.mxu0 0.0
        %1566 = vmatpush.msra.mxu0 0.0
        %1567 = vmatpush.msra.mxu0 0.0
        %1568 = vmatpush.msra.mxu0 0.0
        %1569 = vmatpush.msra.mxu0 0.0
        %1570 = vmatpush.msra.mxu0 0.0
        %1571 = vmatpush.msra.mxu0 0.0
        %v1572 = vand.u32 %v288, 4294901760
        %1573 = vmatpush.msra.mxu0 %v1572
        %v1574 = vand.u32 %v287, 4294901760
        %1575 = vmatpush.msra.mxu0 %v1574
        %v1576 = vand.u32 %v1420, 4294901760
        %1577 = vmatmul.f32.gmra.mxu0 %v1576
        %v1578 = vpop.f32.mrf.mxu0
        %v1579 = vadd.f32 %v1556, %v1578
        %1580 = vdwg.mxu0
        %v1581 = vmul.f32 %v282, %v284
        %v1582 = vmul.f32 %v283, %v285
        %1583 = vmatpush.msra.mxu0 0.0
        %1584 = vmatpush.msra.mxu0 0.0
        %1585 = vmatpush.msra.mxu0 0.0
        %1586 = vmatpush.msra.mxu0 0.0
        %1587 = vmatpush.msra.mxu0 0.0
        %1588 = vmatpush.msra.mxu0 0.0
        %1589 = vmatpush.msra.mxu0 0.0
        %1590 = vmatpush.msra.mxu0 0.0
        %1591 = vmatpush.msra.mxu0 0.0
        %1592 = vmatpush.msra.mxu0 0.0
        %1593 = vmatpush.msra.mxu0 0.0
        %1594 = vmatpush.msra.mxu0 0.0
        %1595 = vmatpush.msra.mxu0 0.0
        %1596 = vmatpush.msra.mxu0 0.0
        %v1597 = vand.u32 %v1582, 4294901760
        %1598 = vmatpush.msra.mxu0 %v1597
        %v1599 = vand.u32 %v1581, 4294901760
        %1600 = vmatpush.msra.mxu0 %v1599
        %v1601 = vand.u32 %v291, 4294901760
        %v1602 = vsub.f32 %v291, %v1601
        %v1603 = vand.u32 %v1602, 4294901760
        %v1604 = vsub.f32 %v1602, %v1603
        %v1605 = vand.u32 %v1604, 4294901760
        %1606 = vmatmul.f32.gmra.mxu0 %v1605
        %v1607 = vpop.f32.mrf.mxu0
        %v1608 = vadd.f32 0.0, %v1607
        %1609 = vdwg.mxu0
        %1610 = vmatpush.msra.mxu0 0.0
        %1611 = vmatpush.msra.mxu0 0.0
        %1612 = vmatpush.msra.mxu0 0.0
        %1613 = vmatpush.msra.mxu0 0.0
        %1614 = vmatpush.msra.mxu0 0.0
        %1615 = vmatpush.msra.mxu0 0.0
        %1616 = vmatpush.msra.mxu0 0.0
        %1617 = vmatpush.msra.mxu0 0.0
        %1618 = vmatpush.msra.mxu0 0.0
        %1619 = vmatpush.msra.mxu0 0.0
        %1620 = vmatpush.msra.mxu0 0.0
        %1621 = vmatpush.msra.mxu0 0.0
        %1622 = vmatpush.msra.mxu0 0.0
        %1623 = vmatpush.msra.mxu0 0.0
        %v1624 = vand.u32 %v1582, 4294901760
        %v1625 = vsub.f32 %v1582, %v1624
        %v1626 = vand.u32 %v1625, 4294901760
        %v1627 = vsub.f32 %v1625, %v1626
        %v1628 = vand.u32 %v1627, 4294901760
        %1629 = vmatpush.msra.mxu0 %v1628
        %v1630 = vand.u32 %v1581, 4294901760
        %v1631 = vsub.f32 %v1581, %v1630
        %v1632 = vand.u32 %v1631, 4294901760
        %v1633 = vsub.f32 %v1631, %v1632
        %v1634 = vand.u32 %v1633, 4294901760
        %1635 = vmatpush.msra.mxu0 %v1634
        %v1636 = vand.u32 %v291, 4294901760
        %1637 = vmatmul.f32.gmra.mxu0 %v1636
        %v1638 = vpop.f32.mrf.mxu0
        %v1639 = vadd.f32 %v1608, %v1638
        %1640 = vdwg.mxu0
        %1641 = vmatpush.msra.mxu0 0.0
        %1642 = vmatpush.msra.mxu0 0.0
        %1643 = vmatpush.msra.mxu0 0.0
        %1644 = vmatpush.msra.mxu0 0.0
        %1645 = vmatpush.msra.mxu0 0.0
        %1646 = vmatpush.msra.mxu0 0.0
        %1647 = vmatpush.msra.mxu0 0.0
        %1648 = vmatpush.msra.mxu0 0.0
        %1649 = vmatpush.msra.mxu0 0.0
        %1650 = vmatpush.msra.mxu0 0.0
        %1651 = vmatpush.msra.mxu0 0.0
        %1652 = vmatpush.msra.mxu0 0.0
        %1653 = vmatpush.msra.mxu0 0.0
        %1654 = vmatpush.msra.mxu0 0.0
        %v1655 = vand.u32 %v1582, 4294901760
        %v1656 = vsub.f32 %v1582, %v1655
        %1657 = vmatpush.msra.mxu0 %v1656
        %v1658 = vand.u32 %v1581, 4294901760
        %v1659 = vsub.f32 %v1581, %v1658
        %1660 = vmatpush.msra.mxu0 %v1659
        %v1661 = vand.u32 %v291, 4294901760
        %v1662 = vsub.f32 %v291, %v1661
        %1663 = vmatmul.f32.gmra.mxu0 %v1662
        %v1664 = vpop.f32.mrf.mxu0
        %v1665 = vadd.f32 %v1639, %v1664
        %1666 = vdwg.mxu0
        %1667 = vmatpush.msra.mxu0 0.0
        %1668 = vmatpush.msra.mxu0 0.0
        %1669 = vmatpush.msra.mxu0 0.0
        %1670 = vmatpush.msra.mxu0 0.0
        %1671 = vmatpush.msra.mxu0 0.0
        %1672 = vmatpush.msra.mxu0 0.0
        %1673 = vmatpush.msra.mxu0 0.0
        %1674 = vmatpush.msra.mxu0 0.0
        %1675 = vmatpush.msra.mxu0 0.0
        %1676 = vmatpush.msra.mxu0 0.0
        %1677 = vmatpush.msra.mxu0 0.0
        %1678 = vmatpush.msra.mxu0 0.0
        %1679 = vmatpush.msra.mxu0 0.0
        %1680 = vmatpush.msra.mxu0 0.0
        %v1681 = vand.u32 %v1582, 4294901760
        %1682 = vmatpush.msra.mxu0 %v1681
        %v1683 = vand.u32 %v1581, 4294901760
        %1684 = vmatpush.msra.mxu0 %v1683
        %v1685 = vand.u32 %v291, 4294901760
        %v1686 = vsub.f32 %v291, %v1685
        %v1687 = vand.u32 %v1686, 4294901760
        %1688 = vmatmul.f32.gmra.mxu0 %v1687
        %v1689 = vpop.f32.mrf.mxu0
        %v1690 = vadd.f32 %v1665, %v1689
        %1691 = vdwg.mxu0
        %1692 = vmatpush.msra.mxu0 0.0
        %1693 = vmatpush.msra.mxu0 0.0
        %1694 = vmatpush.msra.mxu0 0.0
        %1695 = vmatpush.msra.mxu0 0.0
        %1696 = vmatpush.msra.mxu0 0.0
        %1697 = vmatpush.msra.mxu0 0.0
        %1698 = vmatpush.msra.mxu0 0.0
        %1699 = vmatpush.msra.mxu0 0.0
        %1700 = vmatpush.msra.mxu0 0.0
        %1701 = vmatpush.msra.mxu0 0.0
        %1702 = vmatpush.msra.mxu0 0.0
        %1703 = vmatpush.msra.mxu0 0.0
        %1704 = vmatpush.msra.mxu0 0.0
        %1705 = vmatpush.msra.mxu0 0.0
        %v1706 = vand.u32 %v1582, 4294901760
        %v1707 = vsub.f32 %v1582, %v1706
        %v1708 = vand.u32 %v1707, 4294901760
        %1709 = vmatpush.msra.mxu0 %v1708
        %v1710 = vand.u32 %v1581, 4294901760
        %v1711 = vsub.f32 %v1581, %v1710
        %v1712 = vand.u32 %v1711, 4294901760
        %1713 = vmatpush.msra.mxu0 %v1712
        %v1714 = vand.u32 %v291, 4294901760
        %1715 = vmatmul.f32.gmra.mxu0 %v1714
        %v1716 = vpop.f32.mrf.mxu0
        %v1717 = vadd.f32 %v1690, %v1716
        %1718 = vdwg.mxu0
        %1719 = vmatpush.msra.mxu0 0.0
        %1720 = vmatpush.msra.mxu0 0.0
        %1721 = vmatpush.msra.mxu0 0.0
        %1722 = vmatpush.msra.mxu0 0.0
        %1723 = vmatpush.msra.mxu0 0.0
        %1724 = vmatpush.msra.mxu0 0.0
        %1725 = vmatpush.msra.mxu0 0.0
        %1726 = vmatpush.msra.mxu0 0.0
        %1727 = vmatpush.msra.mxu0 0.0
        %1728 = vmatpush.msra.mxu0 0.0
        %1729 = vmatpush.msra.mxu0 0.0
        %1730 = vmatpush.msra.mxu0 0.0
        %1731 = vmatpush.msra.mxu0 0.0
        %1732 = vmatpush.msra.mxu0 0.0
        %v1733 = vand.u32 %v1582, 4294901760
        %1734 = vmatpush.msra.mxu0 %v1733
        %v1735 = vand.u32 %v1581, 4294901760
        %1736 = vmatpush.msra.mxu0 %v1735
        %v1737 = vand.u32 %v291, 4294901760
        %1738 = vmatmul.f32.gmra.mxu0 %v1737
        %v1739 = vpop.f32.mrf.mxu0
        %v1740 = vadd.f32 %v1717, %v1739
        %1741 = vdwg.mxu0
        %v1743 = vsel %vm289, %v1740, 0
        %1745 = vmatpush.msra.mxu0 0.0
        %1746 = vmatpush.msra.mxu0 0.0
        %1747 = vmatpush.msra.mxu0 0.0
        %1748 = vmatpush.msra.mxu0 0.0
        %1749 = vmatpush.msra.mxu0 0.0
        %1750 = vmatpush.msra.mxu0 0.0
        %1751 = vmatpush.msra.mxu0 0.0
        %1752 = vmatpush.msra.mxu0 0.0
        %1753 = vmatpush.msra.mxu0 0.0
        %1754 = vmatpush.msra.mxu0 0.0
        %1755 = vmatpush.msra.mxu0 0.0
        %1756 = vmatpush.msra.mxu0 0.0
        %1757 = vmatpush.msra.mxu0 0.0
        %1758 = vmatpush.msra.mxu0 0.0
        %v1759 = vand.u32 %v288, 4294901760
        %1760 = vmatpush.msra.mxu0 %v1759
        %v1761 = vand.u32 %v287, 4294901760
        %1762 = vmatpush.msra.mxu0 %v1761
        %v1763 = vand.u32 %v1743, 4294901760
        %v1764 = vsub.f32 %v1743, %v1763
        %v1765 = vand.u32 %v1764, 4294901760
        %v1766 = vsub.f32 %v1764, %v1765
        %v1767 = vand.u32 %v1766, 4294901760
        %1768 = vmatmul.f32.gmra.mxu0 %v1767
        %v1769 = vpop.f32.mrf.mxu0
        %v1770 = vadd.f32 0.0, %v1769
        %1771 = vdwg.mxu0
        %1772 = vmatpush.msra.mxu0 0.0
        %1773 = vmatpush.msra.mxu0 0.0
        %1774 = vmatpush.msra.mxu0 0.0
        %1775 = vmatpush.msra.mxu0 0.0
        %1776 = vmatpush.msra.mxu0 0.0
        %1777 = vmatpush.msra.mxu0 0.0
        %1778 = vmatpush.msra.mxu0 0.0
        %1779 = vmatpush.msra.mxu0 0.0
        %1780 = vmatpush.msra.mxu0 0.0
        %1781 = vmatpush.msra.mxu0 0.0
        %1782 = vmatpush.msra.mxu0 0.0
        %1783 = vmatpush.msra.mxu0 0.0
        %1784 = vmatpush.msra.mxu0 0.0
        %1785 = vmatpush.msra.mxu0 0.0
        %v1786 = vand.u32 %v288, 4294901760
        %v1787 = vsub.f32 %v288, %v1786
        %v1788 = vand.u32 %v1787, 4294901760
        %v1789 = vsub.f32 %v1787, %v1788
        %v1790 = vand.u32 %v1789, 4294901760
        %1791 = vmatpush.msra.mxu0 %v1790
        %v1792 = vand.u32 %v287, 4294901760
        %v1793 = vsub.f32 %v287, %v1792
        %v1794 = vand.u32 %v1793, 4294901760
        %v1795 = vsub.f32 %v1793, %v1794
        %v1796 = vand.u32 %v1795, 4294901760
        %1797 = vmatpush.msra.mxu0 %v1796
        %v1798 = vand.u32 %v1743, 4294901760
        %1799 = vmatmul.f32.gmra.mxu0 %v1798
        %v1800 = vpop.f32.mrf.mxu0
        %v1801 = vadd.f32 %v1770, %v1800
        %1802 = vdwg.mxu0
        %1803 = vmatpush.msra.mxu0 0.0
        %1804 = vmatpush.msra.mxu0 0.0
        %1805 = vmatpush.msra.mxu0 0.0
        %1806 = vmatpush.msra.mxu0 0.0
        %1807 = vmatpush.msra.mxu0 0.0
        %1808 = vmatpush.msra.mxu0 0.0
        %1809 = vmatpush.msra.mxu0 0.0
        %1810 = vmatpush.msra.mxu0 0.0
        %1811 = vmatpush.msra.mxu0 0.0
        %1812 = vmatpush.msra.mxu0 0.0
        %1813 = vmatpush.msra.mxu0 0.0
        %1814 = vmatpush.msra.mxu0 0.0
        %1815 = vmatpush.msra.mxu0 0.0
        %1816 = vmatpush.msra.mxu0 0.0
        %v1817 = vand.u32 %v288, 4294901760
        %v1818 = vsub.f32 %v288, %v1817
        %1819 = vmatpush.msra.mxu0 %v1818
        %v1820 = vand.u32 %v287, 4294901760
        %v1821 = vsub.f32 %v287, %v1820
        %1822 = vmatpush.msra.mxu0 %v1821
        %v1823 = vand.u32 %v1743, 4294901760
        %v1824 = vsub.f32 %v1743, %v1823
        %1825 = vmatmul.f32.gmra.mxu0 %v1824
        %v1826 = vpop.f32.mrf.mxu0
        %v1827 = vadd.f32 %v1801, %v1826
        %1828 = vdwg.mxu0
        %1829 = vmatpush.msra.mxu0 0.0
        %1830 = vmatpush.msra.mxu0 0.0
        %1831 = vmatpush.msra.mxu0 0.0
        %1832 = vmatpush.msra.mxu0 0.0
        %1833 = vmatpush.msra.mxu0 0.0
        %1834 = vmatpush.msra.mxu0 0.0
        %1835 = vmatpush.msra.mxu0 0.0
        %1836 = vmatpush.msra.mxu0 0.0
        %1837 = vmatpush.msra.mxu0 0.0
        %1838 = vmatpush.msra.mxu0 0.0
        %1839 = vmatpush.msra.mxu0 0.0
        %1840 = vmatpush.msra.mxu0 0.0
        %1841 = vmatpush.msra.mxu0 0.0
        %1842 = vmatpush.msra.mxu0 0.0
        %v1843 = vand.u32 %v288, 4294901760
        %1844 = vmatpush.msra.mxu0 %v1843
        %v1845 = vand.u32 %v287, 4294901760
        %1846 = vmatpush.msra.mxu0 %v1845
        %v1847 = vand.u32 %v1743, 4294901760
        %v1848 = vsub.f32 %v1743, %v1847
        %v1849 = vand.u32 %v1848, 4294901760
        %1850 = vmatmul.f32.gmra.mxu0 %v1849
        %v1851 = vpop.f32.mrf.mxu0
        %v1852 = vadd.f32 %v1827, %v1851
        %1853 = vdwg.mxu0
        %1854 = vmatpush.msra.mxu0 0.0
        %1855 = vmatpush.msra.mxu0 0.0
        %1856 = vmatpush.msra.mxu0 0.0
        %1857 = vmatpush.msra.mxu0 0.0
        %1858 = vmatpush.msra.mxu0 0.0
        %1859 = vmatpush.msra.mxu0 0.0
        %1860 = vmatpush.msra.mxu0 0.0
        %1861 = vmatpush.msra.mxu0 0.0
        %1862 = vmatpush.msra.mxu0 0.0
        %1863 = vmatpush.msra.mxu0 0.0
        %1864 = vmatpush.msra.mxu0 0.0
        %1865 = vmatpush.msra.mxu0 0.0
        %1866 = vmatpush.msra.mxu0 0.0
        %1867 = vmatpush.msra.mxu0 0.0
        %v1868 = vand.u32 %v288, 4294901760
        %v1869 = vsub.f32 %v288, %v1868
        %v1870 = vand.u32 %v1869, 4294901760
        %1871 = vmatpush.msra.mxu0 %v1870
        %v1872 = vand.u32 %v287, 4294901760
        %v1873 = vsub.f32 %v287, %v1872
        %v1874 = vand.u32 %v1873, 4294901760
        %1875 = vmatpush.msra.mxu0 %v1874
        %v1876 = vand.u32 %v1743, 4294901760
        %1877 = vmatmul.f32.gmra.mxu0 %v1876
        %v1878 = vpop.f32.mrf.mxu0
        %v1879 = vadd.f32 %v1852, %v1878
        %1880 = vdwg.mxu0
        %1881 = vmatpush.msra.mxu0 0.0
        %1882 = vmatpush.msra.mxu0 0.0
        %1883 = vmatpush.msra.mxu0 0.0
        %1884 = vmatpush.msra.mxu0 0.0
        %1885 = vmatpush.msra.mxu0 0.0
        %1886 = vmatpush.msra.mxu0 0.0
        %1887 = vmatpush.msra.mxu0 0.0
        %1888 = vmatpush.msra.mxu0 0.0
        %1889 = vmatpush.msra.mxu0 0.0
        %1890 = vmatpush.msra.mxu0 0.0
        %1891 = vmatpush.msra.mxu0 0.0
        %1892 = vmatpush.msra.mxu0 0.0
        %1893 = vmatpush.msra.mxu0 0.0
        %1894 = vmatpush.msra.mxu0 0.0
        %v1895 = vand.u32 %v288, 4294901760
        %1896 = vmatpush.msra.mxu0 %v1895
        %v1897 = vand.u32 %v287, 4294901760
        %1898 = vmatpush.msra.mxu0 %v1897
        %v1899 = vand.u32 %v1743, 4294901760
        %1900 = vmatmul.f32.gmra.mxu0 %v1899
        %v1901 = vpop.f32.mrf.mxu0
        %v1902 = vadd.f32 %v1879, %v1901
        %1903 = vdwg.mxu0
        %v1904 = vmul.f32 %v612, %v612
        %v1905 = vmul.f32 %v933, %v933
        %v1906 = vmul.f32 %v612, %v933
        %v1907 = vsub.f32 %v1256, %v1904
        %v1908 = vsub.f32 %v1579, %v1905
        %v1909 = vsub.f32 %v1902, %v1906
        %v1910 = vmul.f32 %v1909, 2.0
        %v1911 = vadd.f32 %v1910, 0.0009
        %v1912 = vadd.f32 %v1907, %v1908
        %v1913 = vadd.f32 %v1912, 0.0009
        %v1914 = vrcp.pop %v1913
        %v1915 = vmul.f32 %v1913, %v1914
        %v1916 = vsub.f32 1.0, %v1915
        %v1917 = vmul.f32 %v1914, %v1916
        %v1918 = vadd.f32 %v1914, %v1917
        %vm1919 = vweird.f32 %v1913
        %vm1920 = vweird.f32 %v1914
        %vm1921 = vmor %vm1919, %vm1920
        %v1922 = vsel %vm1921, %v1914, %v1918
        %v1923 = vand.u32 2147483647, %v1913
        %vm1924 = vcmp.eq.f32.partialorder %v1923, 8.507059e+37
        %v1925 = vand.u32 %v1913, 2147483648
        %v1926 = vor.u32 1.1754944e-38, %v1925
        %v1927 = vsel %vm1924, %v1926, %v1922
        %v1928 = vmul.f32 %v1911, %v1927
        %v1929 = vmul.f32 %v1906, 2.0
        %v1930 = vadd.f32 %v1929, 0.0001
        %v1931 = vmul.f32 %v1928, %v1930
        %v1932 = vadd.f32 %v1904, %v1905
        %v1933 = vadd.f32 %v1932, 0.0001
        %v1934 = vrcp.pop %v1933
        %v1935 = vmul.f32 %v1933, %v1934
        %v1936 = vsub.f32 1.0, %v1935
        %v1937 = vmul.f32 %v1934, %v1936
        %v1938 = vadd.f32 %v1934, %v1937
        %vm1939 = vweird.f32 %v1933
        %vm1940 = vweird.f32 %v1934
        %vm1941 = vmor %vm1939, %vm1940
        %v1942 = vsel %vm1941, %v1934, %v1938
        %v1943 = vand.u32 2147483647, %v1933
        %vm1944 = vcmp.eq.f32.partialorder %v1943, 8.507059e+37
        %v1945 = vand.u32 %v1933, 2147483648
        %v1946 = vor.u32 1.1754944e-38, %v1945
        %v1947 = vsel %vm1944, %v1946, %v1942
        %v1948 = vmul.f32 %v1931, %v1947
        %vm1949 = vcmask 46080
        %v1950 = vsel %vm1949, %v1948, 0.0
        %1951 = vadd.xlane.f32.xlu0 %v1950
        %v1952 = vpop.xlane.xlu0 %1951
        %vm1953 = vcmask 1045504
        %v1954 = vsel %vm1953, %v1952, 0.0
        %v1955 = vrot.slane %v1954, 4
        %v1956 = vadd.f32 %v1954, %v1955
        %v1957 = vrot.slane %v1956, 2
        %v1958 = vadd.f32 %v1956, %v1957
        %v1959 = vrot.slane %v1958, 1
        %v1960 = vadd.f32 %v1958, %v1959
        %1961 = vst [vmem:[%s281] sm:$0xff] %v1960
        %s1962 = sand.u32 %s144, 1
        %s1963 = scalar_lea.sflag [#allocation4], %s1962
        %s1964 = sand.u32 %s144, 1
        %s1965 = smul.addr %s1964, 8
        %s1966 = scalar_lea.vmem [#allocation7], %s1965
        // Predicated region
        $region45: #{tpu_custom_call.1} parent=35 // pred_check
          %p1967 = pneg %p154
        $region46: #{tpu_custom_call.1} parent=35 // pred_check_branch
          %1969 = sbr.rel (%p1967) target = $region48
        $region47: #{tpu_custom_call.1} parent=35 // pred_region
          %1971 = vsyncadd %s1963, 0
          %s1972 = smul.addr %s28, 4
          %s1973 = sadd.s32 %s29, %s1972
          %s1974 = smul.addr %s1973, 8
          %s1975 = scalar_lea.hbm %s4, %s1974
          %s1977 = sshll.u32 %s1966, 4
          %s1978 = int_to_ptr.vmem [resolvable:$true] %s1977
          %s1979 = sshll.u32 %s1975, 4
          %s1980 = int_to_ptr.hbm [resolvable:$true] %s1979
          %1982 = dma.vmem_to_hbm [thread:$0]  %s1978, 128, %s1980, %s1963
        $region48: #{tpu_custom_call.1} parent=35 // pred_fallthru
          _
      $region36: #{tpu_custom_call.1} parent=5 // pred_fallthru
        _
      %p1983 = scmp.le.s32.totalorder 2, %s19
      // Predicated region
      $region49: #{tpu_custom_call.1} parent=5 // pred_check
        %p1984 = pneg %p1983
      $region50: #{tpu_custom_call.1} parent=5 // pred_check_branch
        %1986 = sbr.rel (%p1984) target = $region52
      $region51: #{tpu_custom_call.1} parent=5 // pred_region
        %s1987 = ssub.s32 %s19, 2
        // Predicated region
        $region53: #{tpu_custom_call.1} parent=51 // pred_check
          %p1988 = pneg %p160
        $region54: #{tpu_custom_call.1} parent=51 // pred_check_branch
          %1990 = sbr.rel (%p1988) target = $region56
        $region55: #{tpu_custom_call.1} parent=51 // pred_region
          %s1991 = sand.u32 %s145, 1
          %s1992 = scalar_lea.sflag [#allocation4], %s1991
          %s1993 = sand.u32 %s145, 1
          %s1994 = smul.addr %s1993, 8
          %s1995 = scalar_lea.vmem [#allocation7], %s1994
          %1997 = dma.done %s1992, 128
        $region56: #{tpu_custom_call.1} parent=51 // pred_fallthru
          _
      $region52: #{tpu_custom_call.1} parent=5 // pred_fallthru
        _
    $region6: #{tpu_custom_call.1} parent=1 // loop_footer
      %s23 = sadd.s32 1, %s19
    $region7: #{tpu_custom_call.1} parent=1 // loop_footer_branch
      %18 = sbr.rel target = $region3
    $region8: #{tpu_custom_call.1} parent=1 // loop_exit
      _
    %1998 = vsyncpa [#allocation3], 1
    %s1999 = scalar_lea.sflag [#allocation3], 1
    %2000 = vsyncpa %s1999, 1
    %2001 = vsyncpa [#allocation6], 1
    %s2002 = scalar_lea.sflag [#allocation6], 1
    %2003 = vsyncpa %s2002, 1
    %2004 = vsyncpa [#allocation4], 1
    %s2005 = scalar_lea.sflag [#allocation4], 1
    %2006 = vsyncpa %s2005, 1

</llo_original>
